<compile_context>
chip_gen: v5e
topology: v5e:2x2
jax: 0.10.0
libtpu: 0.0.40
codegen_flags: <defaults>
</compile_context>

<pallas_src>
import jax
import jax.numpy as jnp
from jax.experimental import pallas as pl
from jax.experimental.pallas import tpu as pltpu

LN_EPS = 1e-5  # PyTorch nn.LayerNorm default

KERNEL_PARAM_ORDER = (
    "wq", "bq", "wkv", "bkv",     # attention in-projections (K/V fused)
    "wo", "bo",                   # attention out-projection
    "w1T", "b1", "w2T", "b2",     # feed-forward
    "g1", "be1", "g2", "be2",     # LayerNorm affine params
)


def _layer_norm(x, gamma, beta):
    mu = jnp.mean(x, axis=-1, keepdims=True)
    var = jnp.mean((x - mu) ** 2, axis=-1, keepdims=True)
    return (x - mu) * jax.lax.rsqrt(var + LN_EPS) * gamma + beta


def make_attblock_kernel(nhead, compute_dtype, with_attn=True):
    def kernel(src_ref, trg_ref,
               wq_ref, bq_ref, wkv_ref, bkv_ref, wo_ref, bo_ref,
               w1_ref, b1_ref, w2_ref, b2_ref,
               g1_ref, be1_ref, g2_ref, be2_ref,
               out_ref, *attn_refs):
        Bb, Lq, d = src_ref.shape
        Lk = trg_ref.shape[1]
        hd = d // nhead
        g = Bb * nhead
        cdt = compute_dtype

        # Residual kept in f32; everything feeding the MXU is cast to cdt exactly once.
        s_rows = src_ref[...].astype(jnp.float32).reshape(Bb * Lq, d)   # (Bb*Lq, d)
        t_rows = trg_ref[...].reshape(Bb * Lk, d).astype(cdt)           # (Bb*Lk, d)

        # --- dense in-projections (lane-wide N = d / 2d, stationary RHS reused for all
        #     rows).  1/sqrt(head_dim) is already folded into wq / bq offline. ---
        q = (jnp.dot(s_rows.astype(cdt), wq_ref[...],
                     preferred_element_type=jnp.float32) + bq_ref[...]).astype(cdt)
        kv = jnp.dot(t_rows, wkv_ref[...],
                     preferred_element_type=jnp.float32) + bkv_ref[...]   # (Bb*Lk, 2d)
        k = kv[:, :d].astype(cdt)
        v = kv[:, d:].astype(cdt)

        # --- split heads onto the leading (batch) axis once ---
        def to_heads(x, L):
            return x.reshape(Bb, L, nhead, hd).transpose(0, 2, 1, 3).reshape(g, L, hd)

        qh = to_heads(q, Lq)          # (g, Lq, hd)
        kh = to_heads(k, Lk)          # (g, Lk, hd)
        vh = to_heads(v, Lk)          # (g, Lk, hd)

        # --- scaled dot-product attention, batched over (batch block x head) ---
        scores = jnp.einsum("gqe,gke->gqk", qh, kh,
                            preferred_element_type=jnp.float32)          # (g, Lq, Lk)
        scores = scores - jnp.max(scores, axis=-1, keepdims=True)
        e = jnp.exp(scores)
        p = e * pl.reciprocal(jnp.sum(e, axis=-1, keepdims=True), approx=True)

        ctx = jnp.einsum("gqk,gke->gqe", p.astype(cdt), vh,
                         preferred_element_type=jnp.float32)             # (g, Lq, hd)

        # --- one-time head -> lane relayout, then a single dense output projection ---
        ctx_rows = (ctx.astype(cdt)
                    .reshape(Bb, nhead, Lq, hd)
                    .transpose(0, 2, 1, 3)
                    .reshape(Bb * Lq, d))
        attn_out = jnp.dot(ctx_rows, wo_ref[...],
                           preferred_element_type=jnp.float32) + bo_ref[...]

        # --- residual + LayerNorm1 (dropout1 = identity), on flattened rows ---
        x = _layer_norm(s_rows + attn_out, g1_ref[...], be1_ref[...])

        # --- feed-forward (relu) on flattened (Bb*Lq, d) rows ---
        # TODO(synk): on v7x, w1T/w2T could be stored fp8 (MXU-native) to halve resident
        # VMEM and ~double FFN throughput; kept bf16 here for cross-generation accuracy.
        h1 = jnp.maximum(
            jnp.dot(x.astype(cdt), w1_ref[...],
                    preferred_element_type=jnp.float32) + b1_ref[...], 0.0)
        ffn = jnp.dot(h1.astype(cdt), w2_ref[...],
                      preferred_element_type=jnp.float32) + b2_ref[...]
        x = _layer_norm(x + ffn, g2_ref[...], be2_ref[...])   # dropout/dropout2 = identity

        out_ref[...] = x.reshape(Bb, Lq, d).astype(out_ref.dtype)
        if with_attn:
            # nn.MultiheadAttention returns head-averaged attention weights (B, Lq, Lk).
            # TODO(synk): Lk < 128 makes this output lane-sparse (masked stores); pass
            # with_attention=False when the caller does not need the averaged weights.
            attn_refs[0][...] = p.reshape(Bb, nhead, Lq, Lk).mean(axis=1).astype(
                attn_refs[0].dtype)

    return kernel


def _vmem_limit_bytes():
    """Generation-aware VMEM limit: ~75% of physical capacity, capped with headroom."""
    try:
        cap = int(pltpu.get_tpu_info().vmem_capacity_bytes)
    except Exception:
        cap = 128 * 1024 * 1024
    return max(32 * 1024 * 1024, min(cap - 16 * 1024 * 1024, int(cap * 0.75)))


def _pick_batch_block(B, Lq, Lk, d, dff, nhead, weight_bytes, vmem_limit,
                      target_rows=512):
    """Largest divisor of B whose per-step VMEM footprint (resident weights +
    double-buffered I/O blocks + f32 intermediates) fits the budget, preferring grids
    with an even number of steps (v7x megacore) and keeping >= 2 steps when B > 1."""
    def step_bytes(bb):
        io = 4 * 2 * bb * (2 * Lq * d + Lk * d)            # dbl-buffered src/out + trg (f32)
        inter = 4 * bb * (2 * nhead * Lq * Lk               # scores + p (f32)
                          + Lq * dff                        # FFN hidden
                          + 4 * Lq * d + 2 * Lk * d)        # q/kv/ctx/x working set
        return io + inter

    feasible = []
    for bb in range(1, B + 1):
        if B % bb:
            continue
        if bb * Lq > max(target_rows, Lq):
            continue
        if B > 1 and (B // bb) < 2:
            continue
        if bb > 1 and weight_bytes + step_bytes(bb) > 0.8 * vmem_limit:
            continue
        feasible.append(bb)
    if not feasible:
        return 1
    even = [bb for bb in feasible if (B // bb) % 2 == 0]
    pool = even if even else feasible
    return max(pool)


def attblock_forward(src, trg, kparams, nhead, *, with_attention=True, target_rows=512):
    B, Lq, d = src.shape
    _, Lk, _ = trg.shape
    assert d % nhead == 0
    dff = kparams["w1T"].shape[1]
    cdt = kparams["w1T"].dtype

    weight_bytes = sum(int(kparams[n].size) * kparams[n].dtype.itemsize
                       for n in KERNEL_PARAM_ORDER)
    vmem_limit = _vmem_limit_bytes()
    bb = _pick_batch_block(B, Lq, Lk, d, dff, nhead, weight_bytes, vmem_limit,
                           target_rows)
    grid = (B // bb,)

    # Grid-invariant weights/biases: whole array resident in VMEM (single copy, no
    # per-step double-buffered DMA like a blocked spec would get).
    vmem_resident = pl.BlockSpec(memory_space=pltpu.MemorySpace.VMEM)

    in_specs = [
        pl.BlockSpec((bb, Lq, d), lambda b: (b, 0, 0)),   # src: one batch block / step
        pl.BlockSpec((bb, Lk, d), lambda b: (b, 0, 0)),   # trg
    ] + [vmem_resident] * len(KERNEL_PARAM_ORDER)

    out_specs = [pl.BlockSpec((bb, Lq, d), lambda b: (b, 0, 0))]
    out_shape = [jax.ShapeDtypeStruct((B, Lq, d), jnp.float32)]
    if with_attention:
        out_specs.append(pl.BlockSpec((bb, Lq, Lk), lambda b: (b, 0, 0)))
        out_shape.append(jax.ShapeDtypeStruct((B, Lq, Lk), jnp.float32))

    outs = pl.pallas_call(
        make_attblock_kernel(nhead, cdt, with_attn=with_attention),
        grid=grid,
        in_specs=in_specs,
        out_specs=out_specs,
        out_shape=out_shape,
        compiler_params=pltpu.CompilerParams(
            dimension_semantics=("parallel",),    # batch blocks are independent
            vmem_limit_bytes=vmem_limit),
    )(src, trg, *[kparams[name] for name in KERNEL_PARAM_ORDER])

    if with_attention:
        return outs[0], outs[1]
    return outs[0]


def init_params(key, d_model, nhead, dim_feedforward):
    """PyTorch-style f32 parameters (projection weights stored already transposed so
    all matmuls are x @ W with no runtime transpose)."""
    ks = jax.random.split(key, 12)
    sc = 0.1
    return {
        "wqT": sc * jax.random.normal(ks[0], (d_model, d_model), jnp.float32),
        "wkT": sc * jax.random.normal(ks[1], (d_model, d_model), jnp.float32),
        "wvT": sc * jax.random.normal(ks[2], (d_model, d_model), jnp.float32),
        "bq": sc * jax.random.normal(ks[3], (1, d_model), jnp.float32),
        "bk": sc * jax.random.normal(ks[4], (1, d_model), jnp.float32),
        "bv": sc * jax.random.normal(ks[5], (1, d_model), jnp.float32),
        "woT": sc * jax.random.normal(ks[6], (d_model, d_model), jnp.float32),
        "bo": sc * jax.random.normal(ks[7], (1, d_model), jnp.float32),
        "w1T": sc * jax.random.normal(ks[8], (d_model, dim_feedforward), jnp.float32),
        "b1": sc * jax.random.normal(ks[9], (1, dim_feedforward), jnp.float32),
        "w2T": sc * jax.random.normal(ks[10], (dim_feedforward, d_model), jnp.float32),
        "b2": sc * jax.random.normal(ks[11], (1, d_model), jnp.float32),
        "g1": jnp.ones((1, d_model), jnp.float32),
        "be1": jnp.zeros((1, d_model), jnp.float32),
        "g2": jnp.ones((1, d_model), jnp.float32),
        "be2": jnp.zeros((1, d_model), jnp.float32),
    }


def prepare_params(p, nhead, matmul_dtype=jnp.bfloat16):
    """Offline rearrangement into the kernel layout:
      * dense attention projection weights (no per-head split),
      * K and V projections fused into one (d, 2d) weight / (1, 2d) bias,
      * 1/sqrt(head_dim) folded into the q projection (weight + bias),
      * matmul weights stored in bf16 (f32 MXU accumulation in the kernel);
        biases / LayerNorm params stay f32 (all elementwise math is f32)."""
    d = p["wqT"].shape[0]
    assert d % nhead == 0
    hd = d // nhead
    scale = 1.0 / float(hd) ** 0.5
    return {
        "wq": (scale * p["wqT"]).astype(matmul_dtype),
        "bq": (scale * p["bq"]).astype(jnp.float32),
        "wkv": jnp.concatenate([p["wkT"], p["wvT"]], axis=1).astype(matmul_dtype),
        "bkv": jnp.concatenate([p["bk"], p["bv"]], axis=1).astype(jnp.float32),
        "wo": p["woT"].astype(matmul_dtype),
        "bo": p["bo"].astype(jnp.float32),
        "w1T": p["w1T"].astype(matmul_dtype),
        "b1": p["b1"].astype(jnp.float32),
        "w2T": p["w2T"].astype(matmul_dtype),
        "b2": p["b2"].astype(jnp.float32),
        "g1": p["g1"], "be1": p["be1"], "g2": p["g2"], "be2": p["be2"],
    }


def reference(src, trg, p, nhead):
    """Pure-JAX f32 mirror of the PyTorch forward (eval mode)."""
    B, Lq, d = src.shape
    Lk = trg.shape[1]
    hd = d // nhead
    q = src @ p["wqT"] + p["bq"]
    k = trg @ p["wkT"] + p["bk"]
    v = trg @ p["wvT"] + p["bv"]
    qh = q.reshape(B, Lq, nhead, hd).transpose(0, 2, 1, 3)
    kh = k.reshape(B, Lk, nhead, hd).transpose(0, 2, 1, 3)
    vh = v.reshape(B, Lk, nhead, hd).transpose(0, 2, 1, 3)
    scores = jnp.einsum("bhqe,bhke->bhqk", qh, kh) / jnp.sqrt(hd).astype(jnp.float32)
    pattn = jax.nn.softmax(scores, axis=-1)
    ctx = jnp.einsum("bhqk,bhke->bhqe", pattn, vh).transpose(0, 2, 1, 3).reshape(B, Lq, d)
    x = src + (ctx @ p["woT"] + p["bo"])
    x = _layer_norm(x, p["g1"], p["be1"])
    ffn = jax.nn.relu(x @ p["w1T"] + p["b1"]) @ p["w2T"] + p["b2"]
    x = _layer_norm(x + ffn, p["g2"], p["be2"])
    return x, pattn.mean(axis=1)


if __name__ == "__main__":
    B, Lq, Lk, d_model, nhead, dff = 2, 8, 8, 32, 4, 64

    key = jax.random.PRNGKey(0)
    k_src, k_trg, k_par = jax.random.split(key, 3)
    src = jax.random.normal(k_src, (B, Lq, d_model), jnp.float32)
    trg = jax.random.normal(k_trg, (B, Lk, d_model), jnp.float32)

    params = init_params(k_par, d_model, nhead, dff)
    kparams = prepare_params(params, nhead, matmul_dtype=jnp.bfloat16)

    out, attn = attblock_forward(src, trg, kparams, nhead)
    out, attn = jax.block_until_ready((out, attn))

    ref_out, ref_attn = reference(src, trg, params, nhead)
    # bf16 matmul weights (f32 accumulation) vs. the f32 reference -> loosened tolerance.
    assert jnp.allclose(out, ref_out, atol=5e-2, rtol=5e-2), "output mismatch vs reference"
    assert jnp.allclose(attn, ref_attn, atol=2e-2, rtol=2e-2), "attention mismatch vs reference"
    print("KERNEL_OK")
</pallas_src>

<mosaic_0001>
module attributes {stable_mosaic.version = 11 : i64} {
  func.func @kernel(%arg0: i32, %arg1: memref<1x8x32xf32, #tpu.memory_space<vmem>>, %arg2: memref<1x8x32xf32, #tpu.memory_space<vmem>>, %arg3: memref<32x32xbf16, #tpu.memory_space<vmem>>, %arg4: memref<1x32xf32, #tpu.memory_space<vmem>>, %arg5: memref<32x64xbf16, #tpu.memory_space<vmem>>, %arg6: memref<1x64xf32, #tpu.memory_space<vmem>>, %arg7: memref<32x32xbf16, #tpu.memory_space<vmem>>, %arg8: memref<1x32xf32, #tpu.memory_space<vmem>>, %arg9: memref<32x64xbf16, #tpu.memory_space<vmem>>, %arg10: memref<1x64xf32, #tpu.memory_space<vmem>>, %arg11: memref<64x32xbf16, #tpu.memory_space<vmem>>, %arg12: memref<1x32xf32, #tpu.memory_space<vmem>>, %arg13: memref<1x32xf32, #tpu.memory_space<vmem>>, %arg14: memref<1x32xf32, #tpu.memory_space<vmem>>, %arg15: memref<1x32xf32, #tpu.memory_space<vmem>>, %arg16: memref<1x32xf32, #tpu.memory_space<vmem>>, %arg17: memref<1x8x32xf32, #tpu.memory_space<vmem>>, %arg18: memref<1x8x8xf32, #tpu.memory_space<vmem>>) attributes {dimension_semantics = [#tpu.dimension_semantics<parallel>], iteration_bounds = array<i64: 2>, scalar_prefetch = 0 : i64, scratch_operands = 0 : i64, tpu.core_type = #tpu.core_type<tc>, window_params = [{transform_indices = @transform_0, window_bounds = array<i64: 1, 8, 32>}, {transform_indices = @transform_1, window_bounds = array<i64: 1, 8, 32>}, {pipeline_mode = #tpu.pipeline_mode<synchronous>, transform_indices = @transform_2, window_bounds = array<i64: 32, 32>}, {pipeline_mode = #tpu.pipeline_mode<synchronous>, transform_indices = @transform_3, window_bounds = array<i64: 1, 32>}, {pipeline_mode = #tpu.pipeline_mode<synchronous>, transform_indices = @transform_4, window_bounds = array<i64: 32, 64>}, {pipeline_mode = #tpu.pipeline_mode<synchronous>, transform_indices = @transform_5, window_bounds = array<i64: 1, 64>}, {pipeline_mode = #tpu.pipeline_mode<synchronous>, transform_indices = @transform_6, window_bounds = array<i64: 32, 32>}, {pipeline_mode = #tpu.pipeline_mode<synchronous>, transform_indices = @transform_7, window_bounds = array<i64: 1, 32>}, {pipeline_mode = #tpu.pipeline_mode<synchronous>, transform_indices = @transform_8, window_bounds = array<i64: 32, 64>}, {pipeline_mode = #tpu.pipeline_mode<synchronous>, transform_indices = @transform_9, window_bounds = array<i64: 1, 64>}, {pipeline_mode = #tpu.pipeline_mode<synchronous>, transform_indices = @transform_10, window_bounds = array<i64: 64, 32>}, {pipeline_mode = #tpu.pipeline_mode<synchronous>, transform_indices = @transform_11, window_bounds = array<i64: 1, 32>}, {pipeline_mode = #tpu.pipeline_mode<synchronous>, transform_indices = @transform_12, window_bounds = array<i64: 1, 32>}, {pipeline_mode = #tpu.pipeline_mode<synchronous>, transform_indices = @transform_13, window_bounds = array<i64: 1, 32>}, {pipeline_mode = #tpu.pipeline_mode<synchronous>, transform_indices = @transform_14, window_bounds = array<i64: 1, 32>}, {pipeline_mode = #tpu.pipeline_mode<synchronous>, transform_indices = @transform_15, window_bounds = array<i64: 1, 32>}, {transform_indices = @transform_16, window_bounds = array<i64: 1, 8, 32>}, {transform_indices = @transform_17, window_bounds = array<i64: 1, 8, 8>}]} {
    %c0 = arith.constant 0 : index
    %c0_0 = arith.constant 0 : index
    %c0_1 = arith.constant 0 : index
    %0 = vector.load %arg1[%c0, %c0_0, %c0_1] : memref<1x8x32xf32, #tpu.memory_space<vmem>>, vector<1x8x32xf32>
    %1 = vector.shape_cast %0 : vector<1x8x32xf32> to vector<8x32xf32>
    %c0_2 = arith.constant 0 : index
    %c0_3 = arith.constant 0 : index
    %c0_4 = arith.constant 0 : index
    %2 = vector.load %arg2[%c0_2, %c0_3, %c0_4] : memref<1x8x32xf32, #tpu.memory_space<vmem>>, vector<1x8x32xf32>
    %3 = vector.shape_cast %2 : vector<1x8x32xf32> to vector<8x32xf32>
    %4 = arith.truncf %3 : vector<8x32xf32> to vector<8x32xbf16>
    %5 = arith.truncf %1 : vector<8x32xf32> to vector<8x32xbf16>
    %c0_5 = arith.constant 0 : index
    %c0_6 = arith.constant 0 : index
    %6 = vector.load %arg3[%c0_5, %c0_6] : memref<32x32xbf16, #tpu.memory_space<vmem>>, vector<32x32xbf16>
    %cst = arith.constant dense<0.000000e+00> : vector<8x32xf32>
    %7 = tpu.matmul %5, %6, %cst {dimension_numbers = #tpu.dot_dimension_numbers<[1], [0], [0], [1], [0, 0, 1, 1], [], []>} : vector<8x32xbf16>, vector<32x32xbf16>, vector<8x32xf32> -> vector<8x32xf32>
    %c0_7 = arith.constant 0 : index
    %c0_8 = arith.constant 0 : index
    %8 = vector.load %arg4[%c0_7, %c0_8] : memref<1x32xf32, #tpu.memory_space<vmem>>, vector<1x32xf32>
    %9 = vector.broadcast %8 : vector<1x32xf32> to vector<8x32xf32>
    %10 = arith.addf %7, %9 : vector<8x32xf32>
    %11 = arith.truncf %10 : vector<8x32xf32> to vector<8x32xbf16>
    %c0_9 = arith.constant 0 : index
    %c0_10 = arith.constant 0 : index
    %12 = vector.load %arg5[%c0_9, %c0_10] : memref<32x64xbf16, #tpu.memory_space<vmem>>, vector<32x64xbf16>
    %cst_11 = arith.constant dense<0.000000e+00> : vector<8x64xf32>
    %13 = tpu.matmul %4, %12, %cst_11 {dimension_numbers = #tpu.dot_dimension_numbers<[1], [0], [0], [1], [0, 0, 1, 1], [], []>} : vector<8x32xbf16>, vector<32x64xbf16>, vector<8x64xf32> -> vector<8x64xf32>
    %c0_12 = arith.constant 0 : index
    %c0_13 = arith.constant 0 : index
    %14 = vector.load %arg6[%c0_12, %c0_13] : memref<1x64xf32, #tpu.memory_space<vmem>>, vector<1x64xf32>
    %15 = vector.broadcast %14 : vector<1x64xf32> to vector<8x64xf32>
    %16 = arith.addf %13, %15 : vector<8x64xf32>
    %17 = vector.extract_strided_slice %16 {offsets = [0, 0], sizes = [8, 32], strides = [1, 1]} : vector<8x64xf32> to vector<8x32xf32>
    %18 = arith.truncf %17 : vector<8x32xf32> to vector<8x32xbf16>
    %19 = vector.extract_strided_slice %16 {offsets = [0, 32], sizes = [8, 32], strides = [1, 1]} : vector<8x64xf32> to vector<8x32xf32>
    %20 = arith.truncf %19 : vector<8x32xf32> to vector<8x32xbf16>
    %21 = vector.shape_cast %11 : vector<8x32xbf16> to vector<1x8x4x8xbf16>
    %22 = tpu.transpose %21, [0, 2, 1, 3] : vector<1x8x4x8xbf16> -> vector<1x4x8x8xbf16>
    %23 = vector.shape_cast %22 : vector<1x4x8x8xbf16> to vector<4x8x8xbf16>
    %24 = vector.shape_cast %18 : vector<8x32xbf16> to vector<1x8x4x8xbf16>
    %25 = tpu.transpose %24, [0, 2, 1, 3] : vector<1x8x4x8xbf16> -> vector<1x4x8x8xbf16>
    %26 = vector.shape_cast %25 : vector<1x4x8x8xbf16> to vector<4x8x8xbf16>
    %27 = vector.shape_cast %20 : vector<8x32xbf16> to vector<1x8x4x8xbf16>
    %28 = tpu.transpose %27, [0, 2, 1, 3] : vector<1x8x4x8xbf16> -> vector<1x4x8x8xbf16>
    %29 = vector.shape_cast %28 : vector<1x4x8x8xbf16> to vector<4x8x8xbf16>
    "tpu.trace_start"() <{level = 10 : i32, message = "gqe,gke->gqk"}> : () -> ()
    %cst_14 = arith.constant dense<0.000000e+00> : vector<4x8x8xf32>
    %30 = tpu.matmul %23, %26, %cst_14 {dimension_numbers = #tpu.dot_dimension_numbers<[2], [2], [1], [1], [0, 0, 0, 1, 1, 1], [0], [0]>} : vector<4x8x8xbf16>, vector<4x8x8xbf16>, vector<4x8x8xf32> -> vector<4x8x8xf32>
    "tpu.trace_stop"() : () -> ()
    %cst_15 = arith.constant dense<0xFF800000> : vector<4x8xf32>
    %31 = vector.multi_reduction <maximumf>, %30, %cst_15 [2] : vector<4x8x8xf32> to vector<4x8xf32>
    %32 = vector.shape_cast %31 : vector<4x8xf32> to vector<4x8x1xf32>
    %33 = vector.broadcast %32 : vector<4x8x1xf32> to vector<4x8x8xf32>
    %34 = arith.subf %30, %33 : vector<4x8x8xf32>
    %35 = math.exp %34 : vector<4x8x8xf32>
    %cst_16 = arith.constant dense<0.000000e+00> : vector<4x8xf32>
    %36 = vector.multi_reduction <add>, %35, %cst_16 [2] : vector<4x8x8xf32> to vector<4x8xf32>
    %37 = vector.shape_cast %36 : vector<4x8xf32> to vector<4x8x1xf32>
    %38 = tpu.reciprocal %37 {approx = true} : vector<4x8x1xf32> -> vector<4x8x1xf32>
    %39 = vector.broadcast %38 : vector<4x8x1xf32> to vector<4x8x8xf32>
    %40 = arith.mulf %35, %39 : vector<4x8x8xf32>
    %41 = arith.truncf %40 : vector<4x8x8xf32> to vector<4x8x8xbf16>
    "tpu.trace_start"() <{level = 10 : i32, message = "gqk,gke->gqe"}> : () -> ()
    %cst_17 = arith.constant dense<0.000000e+00> : vector<4x8x8xf32>
    %42 = tpu.matmul %41, %29, %cst_17 {dimension_numbers = #tpu.dot_dimension_numbers<[2], [1], [1], [2], [0, 0, 0, 1, 1, 2], [0], [0]>} : vector<4x8x8xbf16>, vector<4x8x8xbf16>, vector<4x8x8xf32> -> vector<4x8x8xf32>
    "tpu.trace_stop"() : () -> ()
    %43 = arith.truncf %42 : vector<4x8x8xf32> to vector<4x8x8xbf16>
    %44 = vector.shape_cast %43 : vector<4x8x8xbf16> to vector<1x4x8x8xbf16>
    %45 = tpu.transpose %44, [0, 2, 1, 3] : vector<1x4x8x8xbf16> -> vector<1x8x4x8xbf16>
    %46 = vector.shape_cast %45 : vector<1x8x4x8xbf16> to vector<8x32xbf16>
    %c0_18 = arith.constant 0 : index
    %c0_19 = arith.constant 0 : index
    %47 = vector.load %arg7[%c0_18, %c0_19] : memref<32x32xbf16, #tpu.memory_space<vmem>>, vector<32x32xbf16>
    %cst_20 = arith.constant dense<0.000000e+00> : vector<8x32xf32>
    %48 = tpu.matmul %46, %47, %cst_20 {dimension_numbers = #tpu.dot_dimension_numbers<[1], [0], [0], [1], [0, 0, 1, 1], [], []>} : vector<8x32xbf16>, vector<32x32xbf16>, vector<8x32xf32> -> vector<8x32xf32>
    %c0_21 = arith.constant 0 : index
    %c0_22 = arith.constant 0 : index
    %49 = vector.load %arg8[%c0_21, %c0_22] : memref<1x32xf32, #tpu.memory_space<vmem>>, vector<1x32xf32>
    %50 = vector.broadcast %49 : vector<1x32xf32> to vector<8x32xf32>
    %51 = arith.addf %48, %50 : vector<8x32xf32>
    %52 = arith.addf %1, %51 : vector<8x32xf32>
    %c0_23 = arith.constant 0 : index
    %c0_24 = arith.constant 0 : index
    %53 = vector.load %arg13[%c0_23, %c0_24] : memref<1x32xf32, #tpu.memory_space<vmem>>, vector<1x32xf32>
    %c0_25 = arith.constant 0 : index
    %c0_26 = arith.constant 0 : index
    %54 = vector.load %arg14[%c0_25, %c0_26] : memref<1x32xf32, #tpu.memory_space<vmem>>, vector<1x32xf32>
    %cst_27 = arith.constant dense<0.000000e+00> : vector<8xf32>
    %55 = vector.multi_reduction <add>, %52, %cst_27 [1] : vector<8x32xf32> to vector<8xf32>
    %56 = vector.shape_cast %55 : vector<8xf32> to vector<8x1xf32>
    %cst_28 = arith.constant 3.200000e+01 : f32
    %57 = vector.broadcast %cst_28 : f32 to vector<8x1xf32>
    %58 = arith.divf %56, %57 : vector<8x1xf32>
    %59 = vector.broadcast %58 : vector<8x1xf32> to vector<8x32xf32>
    %60 = arith.subf %52, %59 : vector<8x32xf32>
    %61 = arith.mulf %60, %60 : vector<8x32xf32>
    %cst_29 = arith.constant dense<0.000000e+00> : vector<8xf32>
    %62 = vector.multi_reduction <add>, %61, %cst_29 [1] : vector<8x32xf32> to vector<8xf32>
    %63 = vector.shape_cast %62 : vector<8xf32> to vector<8x1xf32>
    %cst_30 = arith.constant 3.200000e+01 : f32
    %64 = vector.broadcast %cst_30 : f32 to vector<8x1xf32>
    %65 = arith.divf %63, %64 : vector<8x1xf32>
    %66 = vector.broadcast %58 : vector<8x1xf32> to vector<8x32xf32>
    %67 = arith.subf %52, %66 : vector<8x32xf32>
    %cst_31 = arith.constant 9.99999974E-6 : f32
    %68 = vector.broadcast %cst_31 : f32 to vector<8x1xf32>
    %69 = arith.addf %65, %68 : vector<8x1xf32>
    %70 = math.rsqrt %69 : vector<8x1xf32>
    %71 = vector.broadcast %70 : vector<8x1xf32> to vector<8x32xf32>
    %72 = arith.mulf %67, %71 : vector<8x32xf32>
    %73 = vector.broadcast %53 : vector<1x32xf32> to vector<8x32xf32>
    %74 = arith.mulf %72, %73 : vector<8x32xf32>
    %75 = vector.broadcast %54 : vector<1x32xf32> to vector<8x32xf32>
    %76 = arith.addf %74, %75 : vector<8x32xf32>
    %77 = arith.truncf %76 : vector<8x32xf32> to vector<8x32xbf16>
    %c0_32 = arith.constant 0 : index
    %c0_33 = arith.constant 0 : index
    %78 = vector.load %arg9[%c0_32, %c0_33] : memref<32x64xbf16, #tpu.memory_space<vmem>>, vector<32x64xbf16>
    %cst_34 = arith.constant dense<0.000000e+00> : vector<8x64xf32>
    %79 = tpu.matmul %77, %78, %cst_34 {dimension_numbers = #tpu.dot_dimension_numbers<[1], [0], [0], [1], [0, 0, 1, 1], [], []>} : vector<8x32xbf16>, vector<32x64xbf16>, vector<8x64xf32> -> vector<8x64xf32>
    %c0_35 = arith.constant 0 : index
    %c0_36 = arith.constant 0 : index
    %80 = vector.load %arg10[%c0_35, %c0_36] : memref<1x64xf32, #tpu.memory_space<vmem>>, vector<1x64xf32>
    %81 = vector.broadcast %80 : vector<1x64xf32> to vector<8x64xf32>
    %82 = arith.addf %79, %81 : vector<8x64xf32>
    %cst_37 = arith.constant 0.000000e+00 : f32
    %83 = vector.broadcast %cst_37 : f32 to vector<8x64xf32>
    %84 = arith.maximumf %82, %83 : vector<8x64xf32>
    %85 = arith.truncf %84 : vector<8x64xf32> to vector<8x64xbf16>
    %c0_38 = arith.constant 0 : index
    %c0_39 = arith.constant 0 : index
    %86 = vector.load %arg11[%c0_38, %c0_39] : memref<64x32xbf16, #tpu.memory_space<vmem>>, vector<64x32xbf16>
    %cst_40 = arith.constant dense<0.000000e+00> : vector<8x32xf32>
    %87 = tpu.matmul %85, %86, %cst_40 {dimension_numbers = #tpu.dot_dimension_numbers<[1], [0], [0], [1], [0, 0, 1, 1], [], []>} : vector<8x64xbf16>, vector<64x32xbf16>, vector<8x32xf32> -> vector<8x32xf32>
    %c0_41 = arith.constant 0 : index
    %c0_42 = arith.constant 0 : index
    %88 = vector.load %arg12[%c0_41, %c0_42] : memref<1x32xf32, #tpu.memory_space<vmem>>, vector<1x32xf32>
    %89 = vector.broadcast %88 : vector<1x32xf32> to vector<8x32xf32>
    %90 = arith.addf %87, %89 : vector<8x32xf32>
    %91 = arith.addf %76, %90 : vector<8x32xf32>
    %c0_43 = arith.constant 0 : index
    %c0_44 = arith.constant 0 : index
    %92 = vector.load %arg15[%c0_43, %c0_44] : memref<1x32xf32, #tpu.memory_space<vmem>>, vector<1x32xf32>
    %c0_45 = arith.constant 0 : index
    %c0_46 = arith.constant 0 : index
    %93 = vector.load %arg16[%c0_45, %c0_46] : memref<1x32xf32, #tpu.memory_space<vmem>>, vector<1x32xf32>
    %cst_47 = arith.constant dense<0.000000e+00> : vector<8xf32>
    %94 = vector.multi_reduction <add>, %91, %cst_47 [1] : vector<8x32xf32> to vector<8xf32>
    %95 = vector.shape_cast %94 : vector<8xf32> to vector<8x1xf32>
    %cst_48 = arith.constant 3.200000e+01 : f32
    %96 = vector.broadcast %cst_48 : f32 to vector<8x1xf32>
    %97 = arith.divf %95, %96 : vector<8x1xf32>
    %98 = vector.broadcast %97 : vector<8x1xf32> to vector<8x32xf32>
    %99 = arith.subf %91, %98 : vector<8x32xf32>
    %100 = arith.mulf %99, %99 : vector<8x32xf32>
    %cst_49 = arith.constant dense<0.000000e+00> : vector<8xf32>
    %101 = vector.multi_reduction <add>, %100, %cst_49 [1] : vector<8x32xf32> to vector<8xf32>
    %102 = vector.shape_cast %101 : vector<8xf32> to vector<8x1xf32>
    %cst_50 = arith.constant 3.200000e+01 : f32
    %103 = vector.broadcast %cst_50 : f32 to vector<8x1xf32>
    %104 = arith.divf %102, %103 : vector<8x1xf32>
    %105 = vector.broadcast %97 : vector<8x1xf32> to vector<8x32xf32>
    %106 = arith.subf %91, %105 : vector<8x32xf32>
    %cst_51 = arith.constant 9.99999974E-6 : f32
    %107 = vector.broadcast %cst_51 : f32 to vector<8x1xf32>
    %108 = arith.addf %104, %107 : vector<8x1xf32>
    %109 = math.rsqrt %108 : vector<8x1xf32>
    %110 = vector.broadcast %109 : vector<8x1xf32> to vector<8x32xf32>
    %111 = arith.mulf %106, %110 : vector<8x32xf32>
    %112 = vector.broadcast %92 : vector<1x32xf32> to vector<8x32xf32>
    %113 = arith.mulf %111, %112 : vector<8x32xf32>
    %114 = vector.broadcast %93 : vector<1x32xf32> to vector<8x32xf32>
    %115 = arith.addf %113, %114 : vector<8x32xf32>
    %116 = vector.shape_cast %115 : vector<8x32xf32> to vector<1x8x32xf32>
    %c0_52 = arith.constant 0 : index
    %c0_53 = arith.constant 0 : index
    %c0_54 = arith.constant 0 : index
    %117 = vector.load %arg17[%c0_52, %c0_53, %c0_54] : memref<1x8x32xf32, #tpu.memory_space<vmem>>, vector<1x8x32xf32>
    tpu.vector_store %arg17[%c0_52, %c0_53, %c0_54], %116 {strides = array<i32>} : memref<1x8x32xf32, #tpu.memory_space<vmem>>, vector<1x8x32xf32>,
    %118 = vector.shape_cast %40 : vector<4x8x8xf32> to vector<1x4x8x8xf32>
    %cst_55 = arith.constant dense<0.000000e+00> : vector<1x8x8xf32>
    %119 = vector.multi_reduction <add>, %118, %cst_55 [1] : vector<1x4x8x8xf32> to vector<1x8x8xf32>
    %cst_56 = arith.constant 4.000000e+00 : f32
    %120 = vector.broadcast %cst_56 : f32 to vector<1x8x8xf32>
    %121 = arith.divf %119, %120 : vector<1x8x8xf32>
    %c0_57 = arith.constant 0 : index
    %c0_58 = arith.constant 0 : index
    %c0_59 = arith.constant 0 : index
    %122 = vector.load %arg18[%c0_57, %c0_58, %c0_59] : memref<1x8x8xf32, #tpu.memory_space<vmem>>, vector<1x8x8xf32>
    tpu.vector_store %arg18[%c0_57, %c0_58, %c0_59], %121 {strides = array<i32>} : memref<1x8x8xf32, #tpu.memory_space<vmem>>, vector<1x8x8xf32>,
    return
  }
  func.func @transform_0(%arg0: i32) -> (i32, i32, i32) {
    %c0_i32 = arith.constant 0 : i32
    %c0_i32_0 = arith.constant 0 : i32
    %c0_i32_1 = arith.constant 0 : i32
    return %arg0, %c0_i32, %c0_i32_0 : i32, i32, i32
  }
  func.func @transform_1(%arg0: i32) -> (i32, i32, i32) {
    %c0_i32 = arith.constant 0 : i32
    %c0_i32_0 = arith.constant 0 : i32
    %c0_i32_1 = arith.constant 0 : i32
    return %arg0, %c0_i32, %c0_i32_0 : i32, i32, i32
  }
  func.func @transform_2(%arg0: i32) -> (i32, i32) {
    %c0_i32 = arith.constant 0 : i32
    %c0_i32_0 = arith.constant 0 : i32
    %c0_i32_1 = arith.constant 0 : i32
    return %c0_i32, %c0_i32_0 : i32, i32
  }
  func.func @transform_3(%arg0: i32) -> (i32, i32) {
    %c0_i32 = arith.constant 0 : i32
    %c0_i32_0 = arith.constant 0 : i32
    %c0_i32_1 = arith.constant 0 : i32
    return %c0_i32, %c0_i32_0 : i32, i32
  }
  func.func @transform_4(%arg0: i32) -> (i32, i32) {
    %c0_i32 = arith.constant 0 : i32
    %c0_i32_0 = arith.constant 0 : i32
    %c0_i32_1 = arith.constant 0 : i32
    return %c0_i32, %c0_i32_0 : i32, i32
  }
  func.func @transform_5(%arg0: i32) -> (i32, i32) {
    %c0_i32 = arith.constant 0 : i32
    %c0_i32_0 = arith.constant 0 : i32
    %c0_i32_1 = arith.constant 0 : i32
    return %c0_i32, %c0_i32_0 : i32, i32
  }
  func.func @transform_6(%arg0: i32) -> (i32, i32) {
    %c0_i32 = arith.constant 0 : i32
    %c0_i32_0 = arith.constant 0 : i32
    %c0_i32_1 = arith.constant 0 : i32
    return %c0_i32, %c0_i32_0 : i32, i32
  }
  func.func @transform_7(%arg0: i32) -> (i32, i32) {
    %c0_i32 = arith.constant 0 : i32
    %c0_i32_0 = arith.constant 0 : i32
    %c0_i32_1 = arith.constant 0 : i32
    return %c0_i32, %c0_i32_0 : i32, i32
  }
  func.func @transform_8(%arg0: i32) -> (i32, i32) {
    %c0_i32 = arith.constant 0 : i32
    %c0_i32_0 = arith.constant 0 : i32
    %c0_i32_1 = arith.constant 0 : i32
    return %c0_i32, %c0_i32_0 : i32, i32
  }
  func.func @transform_9(%arg0: i32) -> (i32, i32) {
    %c0_i32 = arith.constant 0 : i32
    %c0_i32_0 = arith.constant 0 : i32
    %c0_i32_1 = arith.constant 0 : i32
    return %c0_i32, %c0_i32_0 : i32, i32
  }
  func.func @transform_10(%arg0: i32) -> (i32, i32) {
    %c0_i32 = arith.constant 0 : i32
    %c0_i32_0 = arith.constant 0 : i32
    %c0_i32_1 = arith.constant 0 : i32
    return %c0_i32, %c0_i32_0 : i32, i32
  }
  func.func @transform_11(%arg0: i32) -> (i32, i32) {
    %c0_i32 = arith.constant 0 : i32
    %c0_i32_0 = arith.constant 0 : i32
    %c0_i32_1 = arith.constant 0 : i32
    return %c0_i32, %c0_i32_0 : i32, i32
  }
  func.func @transform_12(%arg0: i32) -> (i32, i32) {
    %c0_i32 = arith.constant 0 : i32
    %c0_i32_0 = arith.constant 0 : i32
    %c0_i32_1 = arith.constant 0 : i32
    return %c0_i32, %c0_i32_0 : i32, i32
  }
  func.func @transform_13(%arg0: i32) -> (i32, i32) {
    %c0_i32 = arith.constant 0 : i32
    %c0_i32_0 = arith.constant 0 : i32
    %c0_i32_1 = arith.constant 0 : i32
    return %c0_i32, %c0_i32_0 : i32, i32
  }
  func.func @transform_14(%arg0: i32) -> (i32, i32) {
    %c0_i32 = arith.constant 0 : i32
    %c0_i32_0 = arith.constant 0 : i32
    %c0_i32_1 = arith.constant 0 : i32
    return %c0_i32, %c0_i32_0 : i32, i32
  }
  func.func @transform_15(%arg0: i32) -> (i32, i32) {
    %c0_i32 = arith.constant 0 : i32
    %c0_i32_0 = arith.constant 0 : i32
    %c0_i32_1 = arith.constant 0 : i32
    return %c0_i32, %c0_i32_0 : i32, i32
  }
  func.func @transform_16(%arg0: i32) -> (i32, i32, i32) {
    %c0_i32 = arith.constant 0 : i32
    %c0_i32_0 = arith.constant 0 : i32
    %c0_i32_1 = arith.constant 0 : i32
    return %arg0, %c0_i32, %c0_i32_0 : i32, i32, i32
  }
  func.func @transform_17(%arg0: i32) -> (i32, i32, i32) {
    %c0_i32 = arith.constant 0 : i32
    %c0_i32_0 = arith.constant 0 : i32
    %c0_i32_1 = arith.constant 0 : i32
    return %arg0, %c0_i32, %c0_i32_0 : i32, i32, i32
  }
}

</mosaic_0001>

<llo_original>
// kernel: tpu_custom_call.1
$region0: #{tpu_custom_call.1}
  #allocation0 [shape = 'u32[]', space=smem, size = 0x4, offset = 0x4, fixed_abs, tag = 'smem constant byte address 0x4 - core index']
  #allocation1 [shape = 'u32[72,128]{1,0:T(1,128)}', space=vmem, size = 0x9000, scoped, tag = 'internal scratch']
  %s0 = inlined_call_operand.vmem [shape: f32[2,8,32], index: 0, kind: input, shape index: {}]
  %s1 = inlined_call_operand.vmem [shape: f32[2,8,32], index: 1, kind: input, shape index: {}]
  %s2 = inlined_call_operand.vmem [shape: bf16[32,32], index: 2, kind: input, shape index: {}]
  %s3 = inlined_call_operand.vmem [shape: f32[1,32], index: 3, kind: input, shape index: {}]
  %s4 = inlined_call_operand.hbm [shape: bf16[32,64], index: 4, kind: input, shape index: {}]
  %s5 = inlined_call_operand.vmem [shape: f32[1,64], index: 5, kind: input, shape index: {}]
  %s6 = inlined_call_operand.hbm [shape: bf16[32,32], index: 6, kind: input, shape index: {}]
  %s7 = inlined_call_operand.vmem [shape: f32[1,32], index: 7, kind: input, shape index: {}]
  %s8 = inlined_call_operand.hbm [shape: bf16[32,64], index: 8, kind: input, shape index: {}]
  %s9 = inlined_call_operand.vmem [shape: f32[1,64], index: 9, kind: input, shape index: {}]
  %s10 = inlined_call_operand.vmem [shape: bf16[64,32], index: 10, kind: input, shape index: {}]
  %s11 = inlined_call_operand.vmem [shape: f32[1,32], index: 11, kind: input, shape index: {}]
  %s12 = inlined_call_operand.vmem [shape: f32[1,32], index: 12, kind: input, shape index: {}]
  %s13 = inlined_call_operand.vmem [shape: f32[1,32], index: 13, kind: input, shape index: {}]
  %s14 = inlined_call_operand.vmem [shape: f32[1,32], index: 14, kind: input, shape index: {}]
  %s15 = inlined_call_operand.vmem [shape: f32[1,32], index: 15, kind: input, shape index: {}]
  %s16 = inlined_call_operand.hbm [shape: f32[2,8,32], index: 16, kind: output, shape index: {0}]
  %s17 = inlined_call_operand.hbm [shape: f32[2,8,8], index: 17, kind: output, shape index: {1}]
  %18 = xla_tuple %s16, %s17
  %s19 = sld [smem:[#allocation0]]
  $region117: #{tpu_custom_call.1} parent=0
    _
  %s21 = ssub.s32 1, %s19
  %s22 = scalar_select 0, %s21, %s19
  $region1: #{tpu_custom_call.1} parent=0
    #allocation2 [shape = 'u8[8192]{0}', space=vmem, size = 0x2000, scoped, tag = 'input window, operand 4, single buffered']
    #allocation3 [shape = 's32[2]{0}', space=sflag, size = 0x8, scoped, tag = 'scoped memory for tpu_custom_call.1']
    #allocation4 [shape = 's32[2]{0}', space=sflag, size = 0x8, scoped, tag = 'scoped memory for tpu_custom_call.1']
    #allocation5 [shape = 'u8[8192]{0}', space=vmem, size = 0x2000, scoped, tag = 'input window, operand 6, single buffered']
    #allocation6 [shape = 's32[1]{0}', space=sflag, size = 0x4, scoped, tag = 'scoped memory for tpu_custom_call.1']
    #allocation7 [shape = 'u8[8192]{0}', space=vmem, size = 0x2000, scoped, tag = 'input window, operand 8, single buffered']
    #allocation8 [shape = 'u8[8192]{0}', space=vmem, size = 0x2000, scoped, tag = 'output window, operand 0']
    #allocation9 [shape = 'u8[8192]{0}', space=vmem, size = 0x2000, scoped, tag = 'output window, operand 1']
    #allocation10 [shape = 's32[2]{0}', space=sflag, size = 0x8, scoped, tag = 'scoped memory for tpu_custom_call.1']
    %23 = vsyncpa [#allocation3], 0
    %24 = vsyncpa [#allocation6], 0
    %25 = vsyncpa [#allocation4], 0
    %s26 = scalar_lea.sflag [#allocation4], 1
    %27 = vsyncpa %s26, 0
    %28 = vsyncpa [#allocation10], 0
    %s29 = scalar_lea.sflag [#allocation10], 1
    %30 = vsyncpa %s29, 0
    loop: start=0, step=1, limit=4
    $region2: #{tpu_custom_call.1} parent=1 // loop_pre_header
      _
    $region3: #{tpu_custom_call.1} parent=1 // loop_header
      %s32 = sphi 0, %s36
      %p33 = scmp.ge.s32.totalorder %s32, 4
      %s42 = sphi 0, %s44
      %s45 = sphi 0, %s42
      %s46 = sphi 0, %s45
      %s62 = sphi 0, %s46
      %s68 = sphi 0, %s70
      %s71 = sphi 0, %s68
      %s72 = sphi 0, %s71
      %s88 = sphi 0, %s72
      %s92 = sphi 0, %s92
      %s94 = sphi 0, %s92
      %s95 = sphi 0, %s94
      %s109 = sphi 0, %s95
      %s113 = sphi 0, %s113
      %s115 = sphi 0, %s113
      %s116 = sphi 0, %s115
      %s130 = sphi 0, %s116
      %s134 = sphi 0, %s134
      %s136 = sphi 0, %s134
      %s137 = sphi 0, %s136
      %s151 = sphi 0, %s137
      %s155 = sphi 0, %s155
      %s157 = sphi 0, %s155
      %s158 = sphi 0, %s157
      %s172 = sphi 0, %s158
      %s176 = sphi 0, %s176
      %s178 = sphi 0, %s176
      %s179 = sphi 0, %s178
      %s193 = sphi 0, %s179
      %s197 = sphi 0, %s197
      %s199 = sphi 0, %s197
      %s200 = sphi 0, %s199
      %s214 = sphi 0, %s200
      %s218 = sphi 0, %s218
      %s220 = sphi 0, %s218
      %s221 = sphi 0, %s220
      %s235 = sphi 0, %s221
      %s239 = sphi 0, %s239
      %s241 = sphi 0, %s239
      %s242 = sphi 0, %s241
      %s256 = sphi 0, %s242
      %s260 = sphi 0, %s260
      %s262 = sphi 0, %s260
      %s263 = sphi 0, %s262
      %s277 = sphi 0, %s263
      %s281 = sphi 0, %s281
      %s283 = sphi 0, %s281
      %s284 = sphi 0, %s283
      %s298 = sphi 0, %s284
      %s302 = sphi 0, %s302
      %s304 = sphi 0, %s302
      %s305 = sphi 0, %s304
      %s319 = sphi 0, %s305
      %s323 = sphi 0, %s323
      %s325 = sphi 0, %s323
      %s326 = sphi 0, %s325
      %s340 = sphi 0, %s326
      %s344 = sphi 0, %s344
      %s346 = sphi 0, %s344
      %s347 = sphi 0, %s346
      %s361 = sphi 0, %s347
      %s365 = sphi 0, %s365
      %s367 = sphi 0, %s365
      %s368 = sphi 0, %s367
      %s382 = sphi 0, %s368
      %s388 = sphi 0, %s390
      %s391 = sphi 0, %s388
      %s392 = sphi 0, %s391
      %s408 = sphi 0, %s392
      %s414 = sphi 0, %s416
      %s417 = sphi 0, %s414
      %s418 = sphi 0, %s417
      %s434 = sphi 0, %s418
    $region4: #{tpu_custom_call.1} parent=1 // loop_header_branch
      %35 = sbr.rel (%p33) target = $region8
    $region5: #{tpu_custom_call.1} parent=1 // loop_body
      %s37 = ssub.s32 %s32, 1
      %s38 = ssub.s32 %s32, 2
      %s39 = sadd.s32 %s32, 1
      %s40 = ssub.s32 %s32, %s39
      %p41 = scmp.eq.s32.totalorder %s40, 0
      %s43 = sadd.s32 %s42, 1
      %s44 = scalar_select %p41, %s42, %s43
      %p47 = pneg %p41
      %p48 = scmp.eq.s32.totalorder %s32, 1
      %p49 = por %p47, %p48
      %p50 = scmp.ne.s32.totalorder %s42, %s45
      %p51 = scmp.eq.s32.totalorder %s32, 0
      %p52 = por %p50, %p51
      %p53 = scmp.ne.s32.totalorder %s42, %s45
      %p54 = scmp.eq.s32.totalorder %s37, 1
      %p55 = por %p53, %p54
      %p56 = scmp.ne.s32.totalorder %s45, %s46
      %p57 = scmp.eq.s32.totalorder %s37, 0
      %p58 = por %p56, %p57
      %p59 = scmp.ne.s32.totalorder %s45, %s46
      %p60 = scmp.eq.s32.totalorder %s38, 1
      %p61 = por %p59, %p60
      %p63 = scmp.ne.s32.totalorder %s46, %s62
      %p64 = scmp.eq.s32.totalorder %s38, 0
      %p65 = por %p63, %p64
      %s66 = ssub.s32 %s32, %s39
      %p67 = scmp.eq.s32.totalorder %s66, 0
      %s69 = sadd.s32 %s68, 1
      %s70 = scalar_select %p67, %s68, %s69
      %p73 = pneg %p67
      %p74 = scmp.eq.s32.totalorder %s32, 1
      %p75 = por %p73, %p74
      %p76 = scmp.ne.s32.totalorder %s68, %s71
      %p77 = scmp.eq.s32.totalorder %s32, 0
      %p78 = por %p76, %p77
      %p79 = scmp.ne.s32.totalorder %s68, %s71
      %p80 = scmp.eq.s32.totalorder %s37, 1
      %p81 = por %p79, %p80
      %p82 = scmp.ne.s32.totalorder %s71, %s72
      %p83 = scmp.eq.s32.totalorder %s37, 0
      %p84 = por %p82, %p83
      %p85 = scmp.ne.s32.totalorder %s71, %s72
      %p86 = scmp.eq.s32.totalorder %s38, 1
      %p87 = por %p85, %p86
      %p89 = scmp.ne.s32.totalorder %s72, %s88
      %p90 = scmp.eq.s32.totalorder %s38, 0
      %p91 = por %p89, %p90
      %s93 = sadd.s32 %s92, 1
      %p96 = scmp.eq.s32.totalorder %s32, 1
      %p97 = scmp.ne.s32.totalorder %s92, %s94
      %p98 = scmp.eq.s32.totalorder %s32, 0
      %p99 = por %p97, %p98
      %p100 = scmp.ne.s32.totalorder %s92, %s94
      %p101 = scmp.eq.s32.totalorder %s37, 1
      %p102 = por %p100, %p101
      %p103 = scmp.ne.s32.totalorder %s94, %s95
      %p104 = scmp.eq.s32.totalorder %s37, 0
      %p105 = por %p103, %p104
      %p106 = scmp.ne.s32.totalorder %s94, %s95
      %p107 = scmp.eq.s32.totalorder %s38, 1
      %p108 = por %p106, %p107
      %p110 = scmp.ne.s32.totalorder %s95, %s109
      %p111 = scmp.eq.s32.totalorder %s38, 0
      %p112 = por %p110, %p111
      %s114 = sadd.s32 %s113, 1
      %p117 = scmp.eq.s32.totalorder %s32, 1
      %p118 = scmp.ne.s32.totalorder %s113, %s115
      %p119 = scmp.eq.s32.totalorder %s32, 0
      %p120 = por %p118, %p119
      %p121 = scmp.ne.s32.totalorder %s113, %s115
      %p122 = scmp.eq.s32.totalorder %s37, 1
      %p123 = por %p121, %p122
      %p124 = scmp.ne.s32.totalorder %s115, %s116
      %p125 = scmp.eq.s32.totalorder %s37, 0
      %p126 = por %p124, %p125
      %p127 = scmp.ne.s32.totalorder %s115, %s116
      %p128 = scmp.eq.s32.totalorder %s38, 1
      %p129 = por %p127, %p128
      %p131 = scmp.ne.s32.totalorder %s116, %s130
      %p132 = scmp.eq.s32.totalorder %s38, 0
      %p133 = por %p131, %p132
      %s135 = sadd.s32 %s134, 1
      %p138 = scmp.eq.s32.totalorder %s32, 1
      %p139 = scmp.ne.s32.totalorder %s134, %s136
      %p140 = scmp.eq.s32.totalorder %s32, 0
      %p141 = por %p139, %p140
      %p142 = scmp.ne.s32.totalorder %s134, %s136
      %p143 = scmp.eq.s32.totalorder %s37, 1
      %p144 = por %p142, %p143
      %p145 = scmp.ne.s32.totalorder %s136, %s137
      %p146 = scmp.eq.s32.totalorder %s37, 0
      %p147 = por %p145, %p146
      %p148 = scmp.ne.s32.totalorder %s136, %s137
      %p149 = scmp.eq.s32.totalorder %s38, 1
      %p150 = por %p148, %p149
      %p152 = scmp.ne.s32.totalorder %s137, %s151
      %p153 = scmp.eq.s32.totalorder %s38, 0
      %p154 = por %p152, %p153
      %s156 = sadd.s32 %s155, 1
      %p159 = scmp.eq.s32.totalorder %s32, 1
      %p160 = scmp.ne.s32.totalorder %s155, %s157
      %p161 = scmp.eq.s32.totalorder %s32, 0
      %p162 = por %p160, %p161
      %p163 = scmp.ne.s32.totalorder %s155, %s157
      %p164 = scmp.eq.s32.totalorder %s37, 1
      %p165 = por %p163, %p164
      %p166 = scmp.ne.s32.totalorder %s157, %s158
      %p167 = scmp.eq.s32.totalorder %s37, 0
      %p168 = por %p166, %p167
      %p169 = scmp.ne.s32.totalorder %s157, %s158
      %p170 = scmp.eq.s32.totalorder %s38, 1
      %p171 = por %p169, %p170
      %p173 = scmp.ne.s32.totalorder %s158, %s172
      %p174 = scmp.eq.s32.totalorder %s38, 0
      %p175 = por %p173, %p174
      %s177 = sadd.s32 %s176, 1
      %p180 = scmp.eq.s32.totalorder %s32, 1
      %p181 = scmp.ne.s32.totalorder %s176, %s178
      %p182 = scmp.eq.s32.totalorder %s32, 0
      %p183 = por %p181, %p182
      %p184 = scmp.ne.s32.totalorder %s176, %s178
      %p185 = scmp.eq.s32.totalorder %s37, 1
      %p186 = por %p184, %p185
      %p187 = scmp.ne.s32.totalorder %s178, %s179
      %p188 = scmp.eq.s32.totalorder %s37, 0
      %p189 = por %p187, %p188
      %p190 = scmp.ne.s32.totalorder %s178, %s179
      %p191 = scmp.eq.s32.totalorder %s38, 1
      %p192 = por %p190, %p191
      %p194 = scmp.ne.s32.totalorder %s179, %s193
      %p195 = scmp.eq.s32.totalorder %s38, 0
      %p196 = por %p194, %p195
      %s198 = sadd.s32 %s197, 1
      %p201 = scmp.eq.s32.totalorder %s32, 1
      %p202 = scmp.ne.s32.totalorder %s197, %s199
      %p203 = scmp.eq.s32.totalorder %s32, 0
      %p204 = por %p202, %p203
      %p205 = scmp.ne.s32.totalorder %s197, %s199
      %p206 = scmp.eq.s32.totalorder %s37, 1
      %p207 = por %p205, %p206
      %p208 = scmp.ne.s32.totalorder %s199, %s200
      %p209 = scmp.eq.s32.totalorder %s37, 0
      %p210 = por %p208, %p209
      %p211 = scmp.ne.s32.totalorder %s199, %s200
      %p212 = scmp.eq.s32.totalorder %s38, 1
      %p213 = por %p211, %p212
      %p215 = scmp.ne.s32.totalorder %s200, %s214
      %p216 = scmp.eq.s32.totalorder %s38, 0
      %p217 = por %p215, %p216
      %s219 = sadd.s32 %s218, 1
      %p222 = scmp.eq.s32.totalorder %s32, 1
      %p223 = scmp.ne.s32.totalorder %s218, %s220
      %p224 = scmp.eq.s32.totalorder %s32, 0
      %p225 = por %p223, %p224
      %p226 = scmp.ne.s32.totalorder %s218, %s220
      %p227 = scmp.eq.s32.totalorder %s37, 1
      %p228 = por %p226, %p227
      %p229 = scmp.ne.s32.totalorder %s220, %s221
      %p230 = scmp.eq.s32.totalorder %s37, 0
      %p231 = por %p229, %p230
      %p232 = scmp.ne.s32.totalorder %s220, %s221
      %p233 = scmp.eq.s32.totalorder %s38, 1
      %p234 = por %p232, %p233
      %p236 = scmp.ne.s32.totalorder %s221, %s235
      %p237 = scmp.eq.s32.totalorder %s38, 0
      %p238 = por %p236, %p237
      %s240 = sadd.s32 %s239, 1
      %p243 = scmp.eq.s32.totalorder %s32, 1
      %p244 = scmp.ne.s32.totalorder %s239, %s241
      %p245 = scmp.eq.s32.totalorder %s32, 0
      %p246 = por %p244, %p245
      %p247 = scmp.ne.s32.totalorder %s239, %s241
      %p248 = scmp.eq.s32.totalorder %s37, 1
      %p249 = por %p247, %p248
      %p250 = scmp.ne.s32.totalorder %s241, %s242
      %p251 = scmp.eq.s32.totalorder %s37, 0
      %p252 = por %p250, %p251
      %p253 = scmp.ne.s32.totalorder %s241, %s242
      %p254 = scmp.eq.s32.totalorder %s38, 1
      %p255 = por %p253, %p254
      %p257 = scmp.ne.s32.totalorder %s242, %s256
      %p258 = scmp.eq.s32.totalorder %s38, 0
      %p259 = por %p257, %p258
      %s261 = sadd.s32 %s260, 1
      %p264 = scmp.eq.s32.totalorder %s32, 1
      %p265 = scmp.ne.s32.totalorder %s260, %s262
      %p266 = scmp.eq.s32.totalorder %s32, 0
      %p267 = por %p265, %p266
      %p268 = scmp.ne.s32.totalorder %s260, %s262
      %p269 = scmp.eq.s32.totalorder %s37, 1
      %p270 = por %p268, %p269
      %p271 = scmp.ne.s32.totalorder %s262, %s263
      %p272 = scmp.eq.s32.totalorder %s37, 0
      %p273 = por %p271, %p272
      %p274 = scmp.ne.s32.totalorder %s262, %s263
      %p275 = scmp.eq.s32.totalorder %s38, 1
      %p276 = por %p274, %p275
      %p278 = scmp.ne.s32.totalorder %s263, %s277
      %p279 = scmp.eq.s32.totalorder %s38, 0
      %p280 = por %p278, %p279
      %s282 = sadd.s32 %s281, 1
      %p285 = scmp.eq.s32.totalorder %s32, 1
      %p286 = scmp.ne.s32.totalorder %s281, %s283
      %p287 = scmp.eq.s32.totalorder %s32, 0
      %p288 = por %p286, %p287
      %p289 = scmp.ne.s32.totalorder %s281, %s283
      %p290 = scmp.eq.s32.totalorder %s37, 1
      %p291 = por %p289, %p290
      %p292 = scmp.ne.s32.totalorder %s283, %s284
      %p293 = scmp.eq.s32.totalorder %s37, 0
      %p294 = por %p292, %p293
      %p295 = scmp.ne.s32.totalorder %s283, %s284
      %p296 = scmp.eq.s32.totalorder %s38, 1
      %p297 = por %p295, %p296
      %p299 = scmp.ne.s32.totalorder %s284, %s298
      %p300 = scmp.eq.s32.totalorder %s38, 0
      %p301 = por %p299, %p300
      %s303 = sadd.s32 %s302, 1
      %p306 = scmp.eq.s32.totalorder %s32, 1
      %p307 = scmp.ne.s32.totalorder %s302, %s304
      %p308 = scmp.eq.s32.totalorder %s32, 0
      %p309 = por %p307, %p308
      %p310 = scmp.ne.s32.totalorder %s302, %s304
      %p311 = scmp.eq.s32.totalorder %s37, 1
      %p312 = por %p310, %p311
      %p313 = scmp.ne.s32.totalorder %s304, %s305
      %p314 = scmp.eq.s32.totalorder %s37, 0
      %p315 = por %p313, %p314
      %p316 = scmp.ne.s32.totalorder %s304, %s305
      %p317 = scmp.eq.s32.totalorder %s38, 1
      %p318 = por %p316, %p317
      %p320 = scmp.ne.s32.totalorder %s305, %s319
      %p321 = scmp.eq.s32.totalorder %s38, 0
      %p322 = por %p320, %p321
      %s324 = sadd.s32 %s323, 1
      %p327 = scmp.eq.s32.totalorder %s32, 1
      %p328 = scmp.ne.s32.totalorder %s323, %s325
      %p329 = scmp.eq.s32.totalorder %s32, 0
      %p330 = por %p328, %p329
      %p331 = scmp.ne.s32.totalorder %s323, %s325
      %p332 = scmp.eq.s32.totalorder %s37, 1
      %p333 = por %p331, %p332
      %p334 = scmp.ne.s32.totalorder %s325, %s326
      %p335 = scmp.eq.s32.totalorder %s37, 0
      %p336 = por %p334, %p335
      %p337 = scmp.ne.s32.totalorder %s325, %s326
      %p338 = scmp.eq.s32.totalorder %s38, 1
      %p339 = por %p337, %p338
      %p341 = scmp.ne.s32.totalorder %s326, %s340
      %p342 = scmp.eq.s32.totalorder %s38, 0
      %p343 = por %p341, %p342
      %s345 = sadd.s32 %s344, 1
      %p348 = scmp.eq.s32.totalorder %s32, 1
      %p349 = scmp.ne.s32.totalorder %s344, %s346
      %p350 = scmp.eq.s32.totalorder %s32, 0
      %p351 = por %p349, %p350
      %p352 = scmp.ne.s32.totalorder %s344, %s346
      %p353 = scmp.eq.s32.totalorder %s37, 1
      %p354 = por %p352, %p353
      %p355 = scmp.ne.s32.totalorder %s346, %s347
      %p356 = scmp.eq.s32.totalorder %s37, 0
      %p357 = por %p355, %p356
      %p358 = scmp.ne.s32.totalorder %s346, %s347
      %p359 = scmp.eq.s32.totalorder %s38, 1
      %p360 = por %p358, %p359
      %p362 = scmp.ne.s32.totalorder %s347, %s361
      %p363 = scmp.eq.s32.totalorder %s38, 0
      %p364 = por %p362, %p363
      %s366 = sadd.s32 %s365, 1
      %p369 = scmp.eq.s32.totalorder %s32, 1
      %p370 = scmp.ne.s32.totalorder %s365, %s367
      %p371 = scmp.eq.s32.totalorder %s32, 0
      %p372 = por %p370, %p371
      %p373 = scmp.ne.s32.totalorder %s365, %s367
      %p374 = scmp.eq.s32.totalorder %s37, 1
      %p375 = por %p373, %p374
      %p376 = scmp.ne.s32.totalorder %s367, %s368
      %p377 = scmp.eq.s32.totalorder %s37, 0
      %p378 = por %p376, %p377
      %p379 = scmp.ne.s32.totalorder %s367, %s368
      %p380 = scmp.eq.s32.totalorder %s38, 1
      %p381 = por %p379, %p380
      %p383 = scmp.ne.s32.totalorder %s368, %s382
      %p384 = scmp.eq.s32.totalorder %s38, 0
      %p385 = por %p383, %p384
      %s386 = ssub.s32 %s32, %s39
      %p387 = scmp.eq.s32.totalorder %s386, 0
      %s389 = sadd.s32 %s388, 1
      %s390 = scalar_select %p387, %s388, %s389
      %p393 = pneg %p387
      %p394 = scmp.eq.s32.totalorder %s32, 1
      %p395 = por %p393, %p394
      %p396 = scmp.ne.s32.totalorder %s388, %s391
      %p397 = scmp.eq.s32.totalorder %s32, 0
      %p398 = por %p396, %p397
      %p399 = scmp.ne.s32.totalorder %s388, %s391
      %p400 = scmp.eq.s32.totalorder %s37, 1
      %p401 = por %p399, %p400
      %p402 = scmp.ne.s32.totalorder %s391, %s392
      %p403 = scmp.eq.s32.totalorder %s37, 0
      %p404 = por %p402, %p403
      %p405 = scmp.ne.s32.totalorder %s391, %s392
      %p406 = scmp.eq.s32.totalorder %s38, 1
      %p407 = por %p405, %p406
      %p409 = scmp.ne.s32.totalorder %s392, %s408
      %p410 = scmp.eq.s32.totalorder %s38, 0
      %p411 = por %p409, %p410
      %s412 = ssub.s32 %s32, %s39
      %p413 = scmp.eq.s32.totalorder %s412, 0
      %s415 = sadd.s32 %s414, 1
      %s416 = scalar_select %p413, %s414, %s415
      %p419 = pneg %p413
      %p420 = scmp.eq.s32.totalorder %s32, 1
      %p421 = por %p419, %p420
      %p422 = scmp.ne.s32.totalorder %s414, %s417
      %p423 = scmp.eq.s32.totalorder %s32, 0
      %p424 = por %p422, %p423
      %p425 = scmp.ne.s32.totalorder %s414, %s417
      %p426 = scmp.eq.s32.totalorder %s37, 1
      %p427 = por %p425, %p426
      %p428 = scmp.ne.s32.totalorder %s417, %s418
      %p429 = scmp.eq.s32.totalorder %s37, 0
      %p430 = por %p428, %p429
      %p431 = scmp.ne.s32.totalorder %s417, %s418
      %p432 = scmp.eq.s32.totalorder %s38, 1
      %p433 = por %p431, %p432
      %p435 = scmp.ne.s32.totalorder %s418, %s434
      %p436 = scmp.eq.s32.totalorder %s38, 0
      %p437 = por %p435, %p436
      %p438 = scmp.le.s32.totalorder 1, %s32
      %p439 = scmp.lt.s32.totalorder %s32, 3
      %p440 = pnand %p438, %p439
      %p441 = pneg %p440
      // Predicated region
      $region9: #{tpu_custom_call.1} parent=5 // pred_check
        _
      $region10: #{tpu_custom_call.1} parent=5 // pred_check_branch
        %443 = sbr.rel (%p440) target = $region12
      $region11: #{tpu_custom_call.1} parent=5 // pred_region
        %s444 = ssub.s32 %s32, 1
        // Predicated region
        $region13: #{tpu_custom_call.1} parent=11 // pred_check
          %p445 = pneg %p105
        $region14: #{tpu_custom_call.1} parent=11 // pred_check_branch
          %447 = sbr.rel (%p445) target = $region16
        $region15: #{tpu_custom_call.1} parent=11 // pred_region
          _
        $region16: #{tpu_custom_call.1} parent=11 // pred_fallthru
          _
        // Predicated region
        $region17: #{tpu_custom_call.1} parent=11 // pred_check
          %p448 = pneg %p126
        $region18: #{tpu_custom_call.1} parent=11 // pred_check_branch
          %450 = sbr.rel (%p448) target = $region20
        $region19: #{tpu_custom_call.1} parent=11 // pred_region
          _
        $region20: #{tpu_custom_call.1} parent=11 // pred_fallthru
          _
        // Predicated region
        $region21: #{tpu_custom_call.1} parent=11 // pred_check
          %p451 = pneg %p147
        $region22: #{tpu_custom_call.1} parent=11 // pred_check_branch
          %453 = sbr.rel (%p451) target = $region24
        $region23: #{tpu_custom_call.1} parent=11 // pred_region
          %455 = vsyncadd [#allocation3], 0
          %s456 = sshll.u32 %s4, 4
          %s457 = int_to_ptr.hbm [resolvable:$true] %s456
          %s458 = sshll.u32 [#allocation2], 4
          %s459 = int_to_ptr.vmem [resolvable:$true] %s458
          %464 = dma.hbm_to_vmem [thread:$0]  %s457, 256, %s459, [#allocation3], 64, 64, 4
        $region24: #{tpu_custom_call.1} parent=11 // pred_fallthru
          _
        // Predicated region
        $region25: #{tpu_custom_call.1} parent=11 // pred_check
          %p465 = pneg %p168
        $region26: #{tpu_custom_call.1} parent=11 // pred_check_branch
          %467 = sbr.rel (%p465) target = $region28
        $region27: #{tpu_custom_call.1} parent=11 // pred_region
          _
        $region28: #{tpu_custom_call.1} parent=11 // pred_fallthru
          _
        // Predicated region
        $region29: #{tpu_custom_call.1} parent=11 // pred_check
          %p468 = pneg %p189
        $region30: #{tpu_custom_call.1} parent=11 // pred_check_branch
          %470 = sbr.rel (%p468) target = $region32
        $region31: #{tpu_custom_call.1} parent=11 // pred_region
          %472 = vsyncadd [#allocation6], 0
          %s473 = sshll.u32 %s6, 4
          %s474 = int_to_ptr.hbm [resolvable:$true] %s473
          %s475 = sshll.u32 [#allocation5], 4
          %s476 = int_to_ptr.vmem [resolvable:$true] %s475
          %481 = dma.hbm_to_vmem [thread:$0]  %s474, 256, %s476, [#allocation6], 64, 64, 4
        $region32: #{tpu_custom_call.1} parent=11 // pred_fallthru
          _
        // Predicated region
        $region33: #{tpu_custom_call.1} parent=11 // pred_check
          %p482 = pneg %p210
        $region34: #{tpu_custom_call.1} parent=11 // pred_check_branch
          %484 = sbr.rel (%p482) target = $region36
        $region35: #{tpu_custom_call.1} parent=11 // pred_region
          _
        $region36: #{tpu_custom_call.1} parent=11 // pred_fallthru
          _
        // Predicated region
        $region37: #{tpu_custom_call.1} parent=11 // pred_check
          %p485 = pneg %p231
        $region38: #{tpu_custom_call.1} parent=11 // pred_check_branch
          %487 = sbr.rel (%p485) target = $region40
        $region39: #{tpu_custom_call.1} parent=11 // pred_region
          %489 = vsyncadd [#allocation6], 0
          %s490 = sshll.u32 %s8, 4
          %s491 = int_to_ptr.hbm [resolvable:$true] %s490
          %s492 = sshll.u32 [#allocation7], 4
          %s493 = int_to_ptr.vmem [resolvable:$true] %s492
          %498 = dma.hbm_to_vmem [thread:$0]  %s491, 256, %s493, [#allocation6], 64, 64, 4
        $region40: #{tpu_custom_call.1} parent=11 // pred_fallthru
          _
        // Predicated region
        $region41: #{tpu_custom_call.1} parent=11 // pred_check
          %p499 = pneg %p252
        $region42: #{tpu_custom_call.1} parent=11 // pred_check_branch
          %501 = sbr.rel (%p499) target = $region44
        $region43: #{tpu_custom_call.1} parent=11 // pred_region
          _
        $region44: #{tpu_custom_call.1} parent=11 // pred_fallthru
          _
        // Predicated region
        $region45: #{tpu_custom_call.1} parent=11 // pred_check
          %p502 = pneg %p273
        $region46: #{tpu_custom_call.1} parent=11 // pred_check_branch
          %504 = sbr.rel (%p502) target = $region48
        $region47: #{tpu_custom_call.1} parent=11 // pred_region
          _
        $region48: #{tpu_custom_call.1} parent=11 // pred_fallthru
          _
        // Predicated region
        $region49: #{tpu_custom_call.1} parent=11 // pred_check
          %p505 = pneg %p294
        $region50: #{tpu_custom_call.1} parent=11 // pred_check_branch
          %507 = sbr.rel (%p505) target = $region52
        $region51: #{tpu_custom_call.1} parent=11 // pred_region
          _
        $region52: #{tpu_custom_call.1} parent=11 // pred_fallthru
          _
        // Predicated region
        $region53: #{tpu_custom_call.1} parent=11 // pred_check
          %p508 = pneg %p315
        $region54: #{tpu_custom_call.1} parent=11 // pred_check_branch
          %510 = sbr.rel (%p508) target = $region56
        $region55: #{tpu_custom_call.1} parent=11 // pred_region
          _
        $region56: #{tpu_custom_call.1} parent=11 // pred_fallthru
          _
        // Predicated region
        $region57: #{tpu_custom_call.1} parent=11 // pred_check
          %p511 = pneg %p336
        $region58: #{tpu_custom_call.1} parent=11 // pred_check_branch
          %513 = sbr.rel (%p511) target = $region60
        $region59: #{tpu_custom_call.1} parent=11 // pred_region
          _
        $region60: #{tpu_custom_call.1} parent=11 // pred_fallthru
          _
        // Predicated region
        $region61: #{tpu_custom_call.1} parent=11 // pred_check
          %p514 = pneg %p357
        $region62: #{tpu_custom_call.1} parent=11 // pred_check_branch
          %516 = sbr.rel (%p514) target = $region64
        $region63: #{tpu_custom_call.1} parent=11 // pred_region
          _
        $region64: #{tpu_custom_call.1} parent=11 // pred_fallthru
          _
        // Predicated region
        $region65: #{tpu_custom_call.1} parent=11 // pred_check
          %p517 = pneg %p378
        $region66: #{tpu_custom_call.1} parent=11 // pred_check_branch
          %519 = sbr.rel (%p517) target = $region68
        $region67: #{tpu_custom_call.1} parent=11 // pred_region
          _
        $region68: #{tpu_custom_call.1} parent=11 // pred_fallthru
          _
      $region12: #{tpu_custom_call.1} parent=5 // pred_fallthru
        _
      %p520 = scmp.lt.s32.totalorder %s32, 2
      // Predicated region
      $region69: #{tpu_custom_call.1} parent=5 // pred_check
        %p521 = pneg %p520
      $region70: #{tpu_custom_call.1} parent=5 // pred_check_branch
        %523 = sbr.rel (%p521) target = $region72
      $region71: #{tpu_custom_call.1} parent=5 // pred_region
        // Predicated region
        $region73: #{tpu_custom_call.1} parent=71 // pred_check
          %p524 = pneg %p52
        $region74: #{tpu_custom_call.1} parent=71 // pred_check_branch
          %526 = sbr.rel (%p524) target = $region76
        $region75: #{tpu_custom_call.1} parent=71 // pred_region
          %p527 = scmp.lt.s32.totalorder %s32, 1
          %s528 = scalar_select %p527, %s32, 1
          %s529 = smul.addr %s528, 8
          %s530 = scalar_lea.vmem %s0, %s529
        $region76: #{tpu_custom_call.1} parent=71 // pred_fallthru
          _
        // Predicated region
        $region77: #{tpu_custom_call.1} parent=71 // pred_check
          %p531 = pneg %p78
        $region78: #{tpu_custom_call.1} parent=71 // pred_check_branch
          %533 = sbr.rel (%p531) target = $region80
        $region79: #{tpu_custom_call.1} parent=71 // pred_region
          %p534 = scmp.lt.s32.totalorder %s32, 1
          %s535 = scalar_select %p534, %s32, 1
          %s536 = smul.addr %s535, 8
          %s537 = scalar_lea.vmem %s1, %s536
        $region80: #{tpu_custom_call.1} parent=71 // pred_fallthru
          _
      $region72: #{tpu_custom_call.1} parent=5 // pred_fallthru
        _
      %p538 = scmp.le.s32.totalorder 1, %s32
      %p539 = scmp.lt.s32.totalorder %s32, 3
      %p540 = pnand %p538, %p539
      %p541 = pneg %p540
      // Predicated region
      $region81: #{tpu_custom_call.1} parent=5 // pred_check
        _
      $region82: #{tpu_custom_call.1} parent=5 // pred_check_branch
        %543 = sbr.rel (%p540) target = $region84
      $region83: #{tpu_custom_call.1} parent=5 // pred_region
        %s544 = ssub.s32 %s32, 1
        // Predicated region
        $region85: #{tpu_custom_call.1} parent=83 // pred_check
          %p545 = pneg %p147
        $region86: #{tpu_custom_call.1} parent=83 // pred_check_branch
          %547 = sbr.rel (%p545) target = $region88
        $region87: #{tpu_custom_call.1} parent=83 // pred_region
          %549 = dma.done [#allocation3], 256
        $region88: #{tpu_custom_call.1} parent=83 // pred_fallthru
          _
        // Predicated region
        $region89: #{tpu_custom_call.1} parent=83 // pred_check
          %p550 = pneg %p189
        $region90: #{tpu_custom_call.1} parent=83 // pred_check_branch
          %552 = sbr.rel (%p550) target = $region92
        $region91: #{tpu_custom_call.1} parent=83 // pred_region
          %554 = dma.done [#allocation6], 256
        $region92: #{tpu_custom_call.1} parent=83 // pred_fallthru
          _
        // Predicated region
        $region93: #{tpu_custom_call.1} parent=83 // pred_check
          %p555 = pneg %p231
        $region94: #{tpu_custom_call.1} parent=83 // pred_check_branch
          %557 = sbr.rel (%p555) target = $region96
        $region95: #{tpu_custom_call.1} parent=83 // pred_region
          %559 = dma.done [#allocation6], 256
        $region96: #{tpu_custom_call.1} parent=83 // pred_fallthru
          _
        %p560 = scmp.lt.s32.totalorder %s37, 1
        %s561 = scalar_select %p560, %s37, 1
        %s562 = smul.addr %s561, 8
        %s563 = scalar_lea.vmem %s0, %s562
        %p564 = pneg %p58
        %p565 = pneg %p55
        %p566 = scmp.lt.s32.totalorder %s37, 1
        %s567 = scalar_select %p566, %s37, 1
        %s568 = smul.addr %s567, 8
        %s569 = scalar_lea.vmem %s1, %s568
        %p570 = pneg %p84
        %p571 = pneg %p81
        %p572 = pneg %p105
        %p573 = pneg %p102
        %p574 = pneg %p126
        %p575 = pneg %p123
        %p576 = pneg %p147
        %p577 = pneg %p144
        %p578 = pneg %p168
        %p579 = pneg %p165
        %p580 = pneg %p189
        %p581 = pneg %p186
        %p582 = pneg %p210
        %p583 = pneg %p207
        %p584 = pneg %p231
        %p585 = pneg %p228
        %p586 = pneg %p252
        %p587 = pneg %p249
        %p588 = pneg %p273
        %p589 = pneg %p270
        %p590 = pneg %p294
        %p591 = pneg %p291
        %p592 = pneg %p315
        %p593 = pneg %p312
        %p594 = pneg %p336
        %p595 = pneg %p333
        %p596 = pneg %p357
        %p597 = pneg %p354
        %p598 = pneg %p378
        %p599 = pneg %p375
        %p600 = pneg %p404
        %p601 = pneg %p401
        %s602 = sand.u32 %s391, 1
        %s603 = scalar_lea.sflag [#allocation4], %s602
        %s604 = sand.u32 %s391, 1
        %s605 = smul.addr %s604, 8
        %s606 = scalar_lea.vmem [#allocation8], %s605
        %p607 = pneg %p430
        %p608 = pneg %p427
        %s609 = sand.u32 %s417, 1
        %s610 = scalar_lea.sflag [#allocation10], %s609
        %s611 = sand.u32 %s417, 1
        %s612 = smul.addr %s611, 8
        %s613 = scalar_lea.vmem [#allocation9], %s612
        %p614 = scmp.lt.s32.totalorder %s37, 1
        %s615 = scalar_select %p614, %s37, 1
        %s616 = smul.addr %s615, 8
        %s617 = scalar_lea.vmem %s0, %s616
        %p618 = scmp.lt.s32.totalorder %s37, 1
        %s619 = scalar_select %p618, %s37, 1
        %s620 = smul.addr %s619, 8
        %s621 = scalar_lea.vmem %s1, %s620
        %v623 = vld [vmem:[%s617] sm:$0xff]
        %v624 = vld [vmem:[%s621] sm:$0xff]
        %v625 = vpack.c.bf16 %v624, %v624
        %v626 = vpack.c.bf16 %v623, %v623
        %v627 = vld [vmem:[%s2] sm:$0xf]
        %v628 = vld [vmem:[%s2 + $0x4] sm:$0xf]
        %v629 = vld [vmem:[%s2 + $0x8] sm:$0xf]
        %v630 = vld [vmem:[%s2 + $0xc] sm:$0xf]
        %v631 = vld [vmem:[%s3] sm:$0x1]
        %v633 = vperm.slane %v631, 0
        %v639 = vunpack.c.l.b16 %v627
        %v640 = vunpack.c.l.b16 %v628
        %v641 = vunpack.c.l.b16 %v629
        %v642 = vunpack.c.l.b16 %v630
        %v643 = vpack.c.b16 %v640, %v639
        %v644 = vpack.c.b16 %v642, %v641
        %vm647 = vcmask 261120
        %v649 = vsel %vm647, %v626, 0
        %651 = vmatpush.bf16.msra.mxu0 0
        %652 = vmatpush.bf16.msra.mxu0 0
        %653 = vmatpush.bf16.msra.mxu0 0
        %654 = vmatpush.bf16.msra.mxu0 0
        %655 = vmatpush.bf16.msra.mxu0 0
        %656 = vmatpush.bf16.msra.mxu0 0
        %657 = vmatpush.bf16.msra.mxu0 %v644
        %658 = vmatpush.bf16.msra.mxu0 %v643
        %659 = vmatmul.bf16.gmra.mxu0 %v649
        %v660 = vpop.f32.mrf.mxu0
        %v661 = vadd.f32 %v633, %v660
        %v662 = vpop.f32.mrf.mxu0
        %663 = vdwg.mxu0
        %v664 = vpack.c.bf16 %v661, %v661
        %v665 = vld [vmem:[#allocation2] sm:$0xf]
        %v666 = vld [vmem:[#allocation2 + $0x4] sm:$0xf]
        %v667 = vld [vmem:[#allocation2 + $0x8] sm:$0xf]
        %v668 = vld [vmem:[#allocation2 + $0xc] sm:$0xf]
        %v669 = vld [vmem:[%s5] sm:$0x1]
        %v671 = vperm.slane %v669, 0
        %v677 = vunpack.c.l.b16 %v665
        %v678 = vunpack.c.l.b16 %v666
        %v679 = vunpack.c.l.b16 %v667
        %v680 = vunpack.c.l.b16 %v668
        %v681 = vpack.c.b16 %v678, %v677
        %v682 = vpack.c.b16 %v680, %v679
        %v686 = vsel %vm647, %v625, 0
        %688 = vmatpush.bf16.msra.mxu0 0
        %689 = vmatpush.bf16.msra.mxu0 0
        %690 = vmatpush.bf16.msra.mxu0 0
        %691 = vmatpush.bf16.msra.mxu0 0
        %692 = vmatpush.bf16.msra.mxu0 0
        %693 = vmatpush.bf16.msra.mxu0 0
        %694 = vmatpush.bf16.msra.mxu0 %v682
        %695 = vmatpush.bf16.msra.mxu0 %v681
        %696 = vmatmul.bf16.gmra.mxu0 %v686
        %v697 = vpop.f32.mrf.mxu0
        %v698 = vadd.f32 %v671, %v697
        %v699 = vpop.f32.mrf.mxu0
        %700 = vdwg.mxu0
        %v701 = vpack.c.bf16 %v698, %v698
        %703 = vrot.lane.b32.xlu0 %v664, 120
        %v704 = vpop.permute.xlu0 %703
        %705 = vrot.lane.b32.xlu0 %v664, 112
        %v706 = vpop.permute.xlu0 %705
        %707 = vrot.lane.b32.xlu0 %v664, 104
        %v708 = vpop.permute.xlu0 %707
        %v711 = vpack.i.b16 %v704, %v664
        %v712 = vshrl.u32 %v664, 16
        %v713 = vshrl.u32 %v704, 16
        %v714 = vpack.i.b16 %v713, %v712
        %v717 = vpack.i.b16 %v708, %v706
        %v718 = vshrl.u32 %v706, 16
        %v719 = vshrl.u32 %v708, 16
        %v720 = vpack.i.b16 %v719, %v718
        %v723 = vunpack.c.l.s4 1983009808
        %v724 = vunpack.c.0.s8 %v723
        %v725 = vperm.slane %v711, %v724
        %v728 = vunpack.c.l.s4 1983009808
        %v729 = vunpack.c.0.s8 %v728
        %v730 = vperm.slane %v717, %v729
        %v731 = vrot.slane %v730, 4
        %vm732 = vcmask 1047556
        %v733 = vsel %vm732, %v731, %v725
        %v734 = vrot.slane %v725, 4
        %v735 = vsel %vm732, %v730, %v734
        %v737 = vunpack.c.l.s4 1934713408
        %v738 = vunpack.c.0.s8 %v737
        %v739 = vperm.slane %v733, %v738
        %v741 = vunpack.c.l.s4 1934713408
        %v742 = vunpack.c.0.s8 %v741
        %v743 = vperm.slane %v735, %v742
        %v744 = vrot.slane %v739, 4
        %v745 = vsel %vm732, 0, %v744
        %v746 = vrot.slane %v743, 4
        %v747 = vsel %vm732, 0, %v746
        %v750 = vunpack.c.l.s4 1983009808
        %v751 = vunpack.c.0.s8 %v750
        %v752 = vperm.slane %v714, %v751
        %v755 = vunpack.c.l.s4 1983009808
        %v756 = vunpack.c.0.s8 %v755
        %v757 = vperm.slane %v720, %v756
        %v758 = vrot.slane %v757, 4
        %v759 = vsel %vm732, %v758, %v752
        %v760 = vrot.slane %v752, 4
        %v761 = vsel %vm732, %v757, %v760
        %v763 = vunpack.c.l.s4 1934713408
        %v764 = vunpack.c.0.s8 %v763
        %v765 = vperm.slane %v759, %v764
        %v767 = vunpack.c.l.s4 1934713408
        %v768 = vunpack.c.0.s8 %v767
        %v769 = vperm.slane %v761, %v768
        %v770 = vrot.slane %v765, 4
        %v771 = vsel %vm732, 0, %v770
        %v772 = vrot.slane %v769, 4
        %v773 = vsel %vm732, 0, %v772
        %v774 = vsel %vm732, %v746, %v739
        %v776 = vunpack.c.l.s4 1983009808
        %v777 = vunpack.c.0.s8 %v776
        %v778 = vperm.slane %v774, %v777
        %v779 = vrot.slane %v747, 4
        %v780 = vsel %vm732, %v779, %v745
        %v782 = vunpack.c.l.s4 1983009808
        %v783 = vunpack.c.0.s8 %v782
        %v784 = vperm.slane %v780, %v783
        %v785 = vrot.slane %v784, 4
        %v786 = vsel %vm732, %v785, %v778
        %v788 = vunpack.c.l.s4 1934713408
        %v789 = vunpack.c.0.s8 %v788
        %v790 = vperm.slane %v786, %v789
        %v791 = vrot.slane %v790, 4
        %v792 = vsel %vm732, 0, %v791
        %v793 = vsel %vm732, %v772, %v765
        %v795 = vunpack.c.l.s4 1983009808
        %v796 = vunpack.c.0.s8 %v795
        %v797 = vperm.slane %v793, %v796
        %v798 = vrot.slane %v773, 4
        %v799 = vsel %vm732, %v798, %v771
        %v801 = vunpack.c.l.s4 1983009808
        %v802 = vunpack.c.0.s8 %v801
        %v803 = vperm.slane %v799, %v802
        %v804 = vrot.slane %v803, 4
        %v805 = vsel %vm732, %v804, %v797
        %v807 = vunpack.c.l.s4 1934713408
        %v808 = vunpack.c.0.s8 %v807
        %v809 = vperm.slane %v805, %v808
        %v810 = vrot.slane %v809, 4
        %v811 = vsel %vm732, 0, %v810
        %v814 = vpack.i.b16 %v809, %v790
        %v815 = vshrl.u32 %v790, 16
        %v816 = vshrl.u32 %v809, 16
        %v817 = vpack.i.b16 %v816, %v815
        %v820 = vpack.i.b16 %v811, %v792
        %v821 = vshrl.u32 %v792, 16
        %v822 = vshrl.u32 %v811, 16
        %v823 = vpack.i.b16 %v822, %v821
        %825 = vrot.lane.b32.xlu0 %v701, 120
        %v826 = vpop.permute.xlu0 %825
        %827 = vrot.lane.b32.xlu0 %v701, 112
        %v828 = vpop.permute.xlu0 %827
        %829 = vrot.lane.b32.xlu0 %v701, 104
        %v830 = vpop.permute.xlu0 %829
        %v833 = vpack.i.b16 %v826, %v701
        %v834 = vshrl.u32 %v701, 16
        %v835 = vshrl.u32 %v826, 16
        %v836 = vpack.i.b16 %v835, %v834
        %v839 = vpack.i.b16 %v830, %v828
        %v840 = vshrl.u32 %v828, 16
        %v841 = vshrl.u32 %v830, 16
        %v842 = vpack.i.b16 %v841, %v840
        %v845 = vunpack.c.l.s4 1983009808
        %v846 = vunpack.c.0.s8 %v845
        %v847 = vperm.slane %v833, %v846
        %v850 = vunpack.c.l.s4 1983009808
        %v851 = vunpack.c.0.s8 %v850
        %v852 = vperm.slane %v839, %v851
        %v853 = vrot.slane %v852, 4
        %v854 = vsel %vm732, %v853, %v847
        %v855 = vrot.slane %v847, 4
        %v856 = vsel %vm732, %v852, %v855
        %v858 = vunpack.c.l.s4 1934713408
        %v859 = vunpack.c.0.s8 %v858
        %v860 = vperm.slane %v854, %v859
        %v862 = vunpack.c.l.s4 1934713408
        %v863 = vunpack.c.0.s8 %v862
        %v864 = vperm.slane %v856, %v863
        %v865 = vrot.slane %v860, 4
        %v866 = vsel %vm732, 0, %v865
        %v867 = vrot.slane %v864, 4
        %v868 = vsel %vm732, 0, %v867
        %v871 = vunpack.c.l.s4 1983009808
        %v872 = vunpack.c.0.s8 %v871
        %v873 = vperm.slane %v836, %v872
        %v876 = vunpack.c.l.s4 1983009808
        %v877 = vunpack.c.0.s8 %v876
        %v878 = vperm.slane %v842, %v877
        %v879 = vrot.slane %v878, 4
        %v880 = vsel %vm732, %v879, %v873
        %v881 = vrot.slane %v873, 4
        %v882 = vsel %vm732, %v878, %v881
        %v884 = vunpack.c.l.s4 1934713408
        %v885 = vunpack.c.0.s8 %v884
        %v886 = vperm.slane %v880, %v885
        %v888 = vunpack.c.l.s4 1934713408
        %v889 = vunpack.c.0.s8 %v888
        %v890 = vperm.slane %v882, %v889
        %v891 = vrot.slane %v886, 4
        %v892 = vsel %vm732, 0, %v891
        %v893 = vrot.slane %v890, 4
        %v894 = vsel %vm732, 0, %v893
        %v895 = vsel %vm732, %v867, %v860
        %v897 = vunpack.c.l.s4 1983009808
        %v898 = vunpack.c.0.s8 %v897
        %v899 = vperm.slane %v895, %v898
        %v900 = vrot.slane %v868, 4
        %v901 = vsel %vm732, %v900, %v866
        %v903 = vunpack.c.l.s4 1983009808
        %v904 = vunpack.c.0.s8 %v903
        %v905 = vperm.slane %v901, %v904
        %v906 = vrot.slane %v905, 4
        %v907 = vsel %vm732, %v906, %v899
        %v909 = vunpack.c.l.s4 1934713408
        %v910 = vunpack.c.0.s8 %v909
        %v911 = vperm.slane %v907, %v910
        %v912 = vrot.slane %v911, 4
        %v913 = vsel %vm732, 0, %v912
        %v914 = vsel %vm732, %v893, %v886
        %v916 = vunpack.c.l.s4 1983009808
        %v917 = vunpack.c.0.s8 %v916
        %v918 = vperm.slane %v914, %v917
        %v919 = vrot.slane %v894, 4
        %v920 = vsel %vm732, %v919, %v892
        %v922 = vunpack.c.l.s4 1983009808
        %v923 = vunpack.c.0.s8 %v922
        %v924 = vperm.slane %v920, %v923
        %v925 = vrot.slane %v924, 4
        %v926 = vsel %vm732, %v925, %v918
        %v928 = vunpack.c.l.s4 1934713408
        %v929 = vunpack.c.0.s8 %v928
        %v930 = vperm.slane %v926, %v929
        %v931 = vrot.slane %v930, 4
        %v932 = vsel %vm732, 0, %v931
        %v935 = vpack.i.b16 %v930, %v911
        %v936 = vshrl.u32 %v911, 16
        %v937 = vshrl.u32 %v930, 16
        %v938 = vpack.i.b16 %v937, %v936
        %v941 = vpack.i.b16 %v932, %v913
        %v942 = vshrl.u32 %v913, 16
        %v943 = vshrl.u32 %v932, 16
        %v944 = vpack.i.b16 %v943, %v942
        %945 = vrot.lane.b32.xlu0 %v701, 96
        %v946 = vpop.permute.xlu0 %945
        %947 = vrot.lane.b32.xlu0 %v826, 96
        %v948 = vpop.permute.xlu0 %947
        %949 = vrot.lane.b32.xlu0 %v828, 96
        %v950 = vpop.permute.xlu0 %949
        %951 = vrot.lane.b32.xlu0 %v830, 96
        %v952 = vpop.permute.xlu0 %951
        %v955 = vpack.i.b16 %v948, %v946
        %v956 = vshrl.u32 %v946, 16
        %v957 = vshrl.u32 %v948, 16
        %v958 = vpack.i.b16 %v957, %v956
        %v961 = vpack.i.b16 %v952, %v950
        %v962 = vshrl.u32 %v950, 16
        %v963 = vshrl.u32 %v952, 16
        %v964 = vpack.i.b16 %v963, %v962
        %v967 = vunpack.c.l.s4 1983009808
        %v968 = vunpack.c.0.s8 %v967
        %v969 = vperm.slane %v955, %v968
        %v972 = vunpack.c.l.s4 1983009808
        %v973 = vunpack.c.0.s8 %v972
        %v974 = vperm.slane %v961, %v973
        %v975 = vrot.slane %v974, 4
        %v976 = vsel %vm732, %v975, %v969
        %v977 = vrot.slane %v969, 4
        %v978 = vsel %vm732, %v974, %v977
        %v980 = vunpack.c.l.s4 1934713408
        %v981 = vunpack.c.0.s8 %v980
        %v982 = vperm.slane %v976, %v981
        %v984 = vunpack.c.l.s4 1934713408
        %v985 = vunpack.c.0.s8 %v984
        %v986 = vperm.slane %v978, %v985
        %v987 = vrot.slane %v982, 4
        %v988 = vsel %vm732, 0, %v987
        %v989 = vrot.slane %v986, 4
        %v990 = vsel %vm732, 0, %v989
        %v993 = vunpack.c.l.s4 1983009808
        %v994 = vunpack.c.0.s8 %v993
        %v995 = vperm.slane %v958, %v994
        %v998 = vunpack.c.l.s4 1983009808
        %v999 = vunpack.c.0.s8 %v998
        %v1000 = vperm.slane %v964, %v999
        %v1001 = vrot.slane %v1000, 4
        %v1002 = vsel %vm732, %v1001, %v995
        %v1003 = vrot.slane %v995, 4
        %v1004 = vsel %vm732, %v1000, %v1003
        %v1006 = vunpack.c.l.s4 1934713408
        %v1007 = vunpack.c.0.s8 %v1006
        %v1008 = vperm.slane %v1002, %v1007
        %v1010 = vunpack.c.l.s4 1934713408
        %v1011 = vunpack.c.0.s8 %v1010
        %v1012 = vperm.slane %v1004, %v1011
        %v1013 = vrot.slane %v1008, 4
        %v1014 = vsel %vm732, 0, %v1013
        %v1015 = vrot.slane %v1012, 4
        %v1016 = vsel %vm732, 0, %v1015
        %v1017 = vsel %vm732, %v989, %v982
        %v1019 = vunpack.c.l.s4 1983009808
        %v1020 = vunpack.c.0.s8 %v1019
        %v1021 = vperm.slane %v1017, %v1020
        %v1022 = vrot.slane %v990, 4
        %v1023 = vsel %vm732, %v1022, %v988
        %v1025 = vunpack.c.l.s4 1983009808
        %v1026 = vunpack.c.0.s8 %v1025
        %v1027 = vperm.slane %v1023, %v1026
        %v1028 = vrot.slane %v1027, 4
        %v1029 = vsel %vm732, %v1028, %v1021
        %v1031 = vunpack.c.l.s4 1934713408
        %v1032 = vunpack.c.0.s8 %v1031
        %v1033 = vperm.slane %v1029, %v1032
        %v1034 = vrot.slane %v1033, 4
        %v1035 = vsel %vm732, 0, %v1034
        %v1036 = vsel %vm732, %v1015, %v1008
        %v1038 = vunpack.c.l.s4 1983009808
        %v1039 = vunpack.c.0.s8 %v1038
        %v1040 = vperm.slane %v1036, %v1039
        %v1041 = vrot.slane %v1016, 4
        %v1042 = vsel %vm732, %v1041, %v1014
        %v1044 = vunpack.c.l.s4 1983009808
        %v1045 = vunpack.c.0.s8 %v1044
        %v1046 = vperm.slane %v1042, %v1045
        %v1047 = vrot.slane %v1046, 4
        %v1048 = vsel %vm732, %v1047, %v1040
        %v1050 = vunpack.c.l.s4 1934713408
        %v1051 = vunpack.c.0.s8 %v1050
        %v1052 = vperm.slane %v1048, %v1051
        %v1053 = vrot.slane %v1052, 4
        %v1054 = vsel %vm732, 0, %v1053
        %v1057 = vpack.i.b16 %v1052, %v1033
        %v1058 = vshrl.u32 %v1033, 16
        %v1059 = vshrl.u32 %v1052, 16
        %v1060 = vpack.i.b16 %v1059, %v1058
        %v1063 = vpack.i.b16 %v1054, %v1035
        %v1064 = vshrl.u32 %v1035, 16
        %v1065 = vshrl.u32 %v1054, 16
        %v1066 = vpack.i.b16 %v1065, %v1064
        %vm1067 = vcmask 64512
        %v1069 = vsel %vm1067, %v814, 0
        %v1072 = vsel %vm1067, %v935, 0
        %1074 = vmatpush.bf16.xpose.msra.mxu0 0
        %1075 = vmatpush.bf16.xpose.msra.mxu0 0
        %1076 = vmatpush.bf16.xpose.msra.mxu0 0
        %1077 = vmatpush.bf16.xpose.msra.mxu0 0
        %1078 = vmatpush.bf16.xpose.msra.mxu0 0
        %1079 = vmatpush.bf16.xpose.msra.mxu0 0
        %1080 = vmatpush.bf16.xpose.msra.mxu0 0
        %1081 = vmatpush.bf16.xpose.msra.mxu0 %v1072
        %1082 = vmatmul.bf16.gmra.mxu0 %v1069
        %v1083 = vpop.f32.mrf.mxu0
        %v1084 = vadd.f32 0.0, %v1083
        %v1085 = vpop.f32.mrf.mxu0
        %1086 = vdwg.mxu0
        %v1088 = vsel %vm1067, %v817, 0
        %v1091 = vsel %vm1067, %v938, 0
        %1093 = vmatpush.bf16.xpose.msra.mxu0 0
        %1094 = vmatpush.bf16.xpose.msra.mxu0 0
        %1095 = vmatpush.bf16.xpose.msra.mxu0 0
        %1096 = vmatpush.bf16.xpose.msra.mxu0 0
        %1097 = vmatpush.bf16.xpose.msra.mxu0 0
        %1098 = vmatpush.bf16.xpose.msra.mxu0 0
        %1099 = vmatpush.bf16.xpose.msra.mxu0 0
        %1100 = vmatpush.bf16.xpose.msra.mxu0 %v1091
        %1101 = vmatmul.bf16.gmra.mxu0 %v1088
        %v1102 = vpop.f32.mrf.mxu0
        %v1103 = vadd.f32 0.0, %v1102
        %v1104 = vpop.f32.mrf.mxu0
        %1105 = vdwg.mxu0
        %v1107 = vsel %vm1067, %v820, 0
        %v1110 = vsel %vm1067, %v941, 0
        %1112 = vmatpush.bf16.xpose.msra.mxu0 0
        %1113 = vmatpush.bf16.xpose.msra.mxu0 0
        %1114 = vmatpush.bf16.xpose.msra.mxu0 0
        %1115 = vmatpush.bf16.xpose.msra.mxu0 0
        %1116 = vmatpush.bf16.xpose.msra.mxu0 0
        %1117 = vmatpush.bf16.xpose.msra.mxu0 0
        %1118 = vmatpush.bf16.xpose.msra.mxu0 0
        %1119 = vmatpush.bf16.xpose.msra.mxu0 %v1110
        %1120 = vmatmul.bf16.gmra.mxu0 %v1107
        %v1121 = vpop.f32.mrf.mxu0
        %v1122 = vadd.f32 0.0, %v1121
        %v1123 = vpop.f32.mrf.mxu0
        %1124 = vdwg.mxu0
        %v1126 = vsel %vm1067, %v823, 0
        %v1129 = vsel %vm1067, %v944, 0
        %1131 = vmatpush.bf16.xpose.msra.mxu0 0
        %1132 = vmatpush.bf16.xpose.msra.mxu0 0
        %1133 = vmatpush.bf16.xpose.msra.mxu0 0
        %1134 = vmatpush.bf16.xpose.msra.mxu0 0
        %1135 = vmatpush.bf16.xpose.msra.mxu0 0
        %1136 = vmatpush.bf16.xpose.msra.mxu0 0
        %1137 = vmatpush.bf16.xpose.msra.mxu0 0
        %1138 = vmatpush.bf16.xpose.msra.mxu0 %v1129
        %1139 = vmatmul.bf16.gmra.mxu0 %v1126
        %v1140 = vpop.f32.mrf.mxu0
        %v1141 = vadd.f32 0.0, %v1140
        %v1142 = vpop.f32.mrf.mxu0
        %1143 = vdwg.mxu0
        %v1144 = vsel %vm1067, %v1084, -inf
        %1145 = vmax.xlane.f32.xlu0 %v1144
        %v1146 = vpop.xlane.xlu0 %1145
        %v1147 = vsel %vm1067, %v1103, -inf
        %1148 = vmax.xlane.f32.xlu0 %v1147
        %v1149 = vpop.xlane.xlu0 %1148
        %v1150 = vsel %vm1067, %v1122, -inf
        %1151 = vmax.xlane.f32.xlu0 %v1150
        %v1152 = vpop.xlane.xlu0 %1151
        %v1153 = vsel %vm1067, %v1141, -inf
        %1154 = vmax.xlane.f32.xlu0 %v1153
        %v1155 = vpop.xlane.xlu0 %1154
        %v1156 = vsub.f32 %v1084, %v1146
        %v1157 = vsub.f32 %v1103, %v1149
        %v1158 = vsub.f32 %v1122, %v1152
        %v1159 = vsub.f32 %v1141, %v1155
        %v1160 = vmul.f32 %v1156, 1.442695
        %v1161 = vpow.pop %v1160
        %v1162 = vmul.f32 %v1157, 1.442695
        %v1163 = vpow.pop %v1162
        %v1164 = vmul.f32 %v1158, 1.442695
        %v1165 = vpow.pop %v1164
        %v1166 = vmul.f32 %v1159, 1.442695
        %v1167 = vpow.pop %v1166
        %v1168 = vsel %vm1067, %v1161, 0.0
        %1169 = vadd.xlane.f32.xlu0 %v1168
        %v1170 = vpop.xlane.xlu0 %1169
        %v1171 = vsel %vm1067, %v1163, 0.0
        %1172 = vadd.xlane.f32.xlu0 %v1171
        %v1173 = vpop.xlane.xlu0 %1172
        %v1174 = vsel %vm1067, %v1165, 0.0
        %1175 = vadd.xlane.f32.xlu0 %v1174
        %v1176 = vpop.xlane.xlu0 %1175
        %v1177 = vsel %vm1067, %v1167, 0.0
        %1178 = vadd.xlane.f32.xlu0 %v1177
        %v1179 = vpop.xlane.xlu0 %1178
        %v1180 = vrcp.pop %v1170
        %v1181 = vrcp.pop %v1173
        %v1182 = vrcp.pop %v1176
        %v1183 = vrcp.pop %v1179
        %v1184 = vmul.f32 %v1161, %v1180
        %v1185 = vmul.f32 %v1163, %v1181
        %v1186 = vmul.f32 %v1165, %v1182
        %v1187 = vmul.f32 %v1167, %v1183
        %v1188 = vpack.c.bf16 %v1184, %v1184
        %v1189 = vpack.c.bf16 %v1185, %v1185
        %v1190 = vpack.c.bf16 %v1186, %v1186
        %v1191 = vpack.c.bf16 %v1187, %v1187
        %v1193 = vsel %vm1067, %v1188, 0
        %vm1195 = vcmask 1043456
        %v1197 = vsel %vm1195, %v1057, 0
        %1199 = vmatpush.bf16.msra.mxu0 0
        %1200 = vmatpush.bf16.msra.mxu0 0
        %1201 = vmatpush.bf16.msra.mxu0 0
        %1202 = vmatpush.bf16.msra.mxu0 0
        %1203 = vmatpush.bf16.msra.mxu0 0
        %1204 = vmatpush.bf16.msra.mxu0 0
        %1205 = vmatpush.bf16.msra.mxu0 0
        %1206 = vmatpush.bf16.msra.mxu0 %v1197
        %1207 = vmatmul.bf16.gmra.mxu0 %v1193
        %v1208 = vpop.f32.mrf.mxu0
        %v1209 = vadd.f32 0.0, %v1208
        %v1210 = vpop.f32.mrf.mxu0
        %1211 = vdwg.mxu0
        %v1213 = vsel %vm1067, %v1189, 0
        %v1216 = vsel %vm1195, %v1060, 0
        %1218 = vmatpush.bf16.msra.mxu0 0
        %1219 = vmatpush.bf16.msra.mxu0 0
        %1220 = vmatpush.bf16.msra.mxu0 0
        %1221 = vmatpush.bf16.msra.mxu0 0
        %1222 = vmatpush.bf16.msra.mxu0 0
        %1223 = vmatpush.bf16.msra.mxu0 0
        %1224 = vmatpush.bf16.msra.mxu0 0
        %1225 = vmatpush.bf16.msra.mxu0 %v1216
        %1226 = vmatmul.bf16.gmra.mxu0 %v1213
        %v1227 = vpop.f32.mrf.mxu0
        %v1228 = vadd.f32 0.0, %v1227
        %v1229 = vpop.f32.mrf.mxu0
        %1230 = vdwg.mxu0
        %v1232 = vsel %vm1067, %v1190, 0
        %v1235 = vsel %vm1195, %v1063, 0
        %1237 = vmatpush.bf16.msra.mxu0 0
        %1238 = vmatpush.bf16.msra.mxu0 0
        %1239 = vmatpush.bf16.msra.mxu0 0
        %1240 = vmatpush.bf16.msra.mxu0 0
        %1241 = vmatpush.bf16.msra.mxu0 0
        %1242 = vmatpush.bf16.msra.mxu0 0
        %1243 = vmatpush.bf16.msra.mxu0 0
        %1244 = vmatpush.bf16.msra.mxu0 %v1235
        %1245 = vmatmul.bf16.gmra.mxu0 %v1232
        %v1246 = vpop.f32.mrf.mxu0
        %v1247 = vadd.f32 0.0, %v1246
        %v1248 = vpop.f32.mrf.mxu0
        %1249 = vdwg.mxu0
        %v1251 = vsel %vm1067, %v1191, 0
        %v1254 = vsel %vm1195, %v1066, 0
        %1256 = vmatpush.bf16.msra.mxu0 0
        %1257 = vmatpush.bf16.msra.mxu0 0
        %1258 = vmatpush.bf16.msra.mxu0 0
        %1259 = vmatpush.bf16.msra.mxu0 0
        %1260 = vmatpush.bf16.msra.mxu0 0
        %1261 = vmatpush.bf16.msra.mxu0 0
        %1262 = vmatpush.bf16.msra.mxu0 0
        %1263 = vmatpush.bf16.msra.mxu0 %v1254
        %1264 = vmatmul.bf16.gmra.mxu0 %v1251
        %v1265 = vpop.f32.mrf.mxu0
        %v1266 = vadd.f32 0.0, %v1265
        %v1267 = vpop.f32.mrf.mxu0
        %1268 = vdwg.mxu0
        %v1269 = vpack.c.bf16 %v1209, %v1209
        %v1270 = vpack.c.bf16 %v1228, %v1228
        %v1271 = vpack.c.bf16 %v1247, %v1247
        %v1272 = vpack.c.bf16 %v1266, %v1266
        %v1275 = vpack.i.b16 %v1270, %v1269
        %v1276 = vshrl.u32 %v1269, 16
        %v1277 = vshrl.u32 %v1270, 16
        %v1278 = vpack.i.b16 %v1277, %v1276
        %v1281 = vpack.i.b16 %v1272, %v1271
        %v1282 = vshrl.u32 %v1271, 16
        %v1283 = vshrl.u32 %v1272, 16
        %v1284 = vpack.i.b16 %v1283, %v1282
        %v1287 = vunpack.c.l.s4 1983009808
        %v1288 = vunpack.c.0.s8 %v1287
        %v1289 = vperm.slane %v1275, %v1288
        %v1292 = vunpack.c.l.s4 1983009808
        %v1293 = vunpack.c.0.s8 %v1292
        %v1294 = vperm.slane %v1281, %v1293
        %v1295 = vrot.slane %v1294, 4
        %v1296 = vsel %vm732, %v1295, %v1289
        %v1297 = vrot.slane %v1289, 4
        %v1298 = vsel %vm732, %v1294, %v1297
        %v1300 = vunpack.c.l.s4 1934713408
        %v1301 = vunpack.c.0.s8 %v1300
        %v1302 = vperm.slane %v1296, %v1301
        %v1304 = vunpack.c.l.s4 1934713408
        %v1305 = vunpack.c.0.s8 %v1304
        %v1306 = vperm.slane %v1298, %v1305
        %v1307 = vrot.slane %v1302, 4
        %v1308 = vsel %vm732, 0, %v1307
        %v1309 = vrot.slane %v1306, 4
        %v1310 = vsel %vm732, 0, %v1309
        %v1313 = vunpack.c.l.s4 1983009808
        %v1314 = vunpack.c.0.s8 %v1313
        %v1315 = vperm.slane %v1278, %v1314
        %v1318 = vunpack.c.l.s4 1983009808
        %v1319 = vunpack.c.0.s8 %v1318
        %v1320 = vperm.slane %v1284, %v1319
        %v1321 = vrot.slane %v1320, 4
        %v1322 = vsel %vm732, %v1321, %v1315
        %v1323 = vrot.slane %v1315, 4
        %v1324 = vsel %vm732, %v1320, %v1323
        %v1326 = vunpack.c.l.s4 1934713408
        %v1327 = vunpack.c.0.s8 %v1326
        %v1328 = vperm.slane %v1322, %v1327
        %v1330 = vunpack.c.l.s4 1934713408
        %v1331 = vunpack.c.0.s8 %v1330
        %v1332 = vperm.slane %v1324, %v1331
        %v1333 = vrot.slane %v1328, 4
        %v1334 = vsel %vm732, 0, %v1333
        %v1335 = vrot.slane %v1332, 4
        %v1336 = vsel %vm732, 0, %v1335
        %v1337 = vsel %vm732, %v1309, %v1302
        %v1339 = vunpack.c.l.s4 1983009808
        %v1340 = vunpack.c.0.s8 %v1339
        %v1341 = vperm.slane %v1337, %v1340
        %v1342 = vrot.slane %v1310, 4
        %v1343 = vsel %vm732, %v1342, %v1308
        %v1345 = vunpack.c.l.s4 1983009808
        %v1346 = vunpack.c.0.s8 %v1345
        %v1347 = vperm.slane %v1343, %v1346
        %v1348 = vrot.slane %v1347, 4
        %v1349 = vsel %vm732, %v1348, %v1341
        %v1351 = vunpack.c.l.s4 1934713408
        %v1352 = vunpack.c.0.s8 %v1351
        %v1353 = vperm.slane %v1349, %v1352
        %v1354 = vrot.slane %v1353, 4
        %v1355 = vsel %vm732, 0, %v1354
        %v1356 = vsel %vm732, %v1335, %v1328
        %v1358 = vunpack.c.l.s4 1983009808
        %v1359 = vunpack.c.0.s8 %v1358
        %v1360 = vperm.slane %v1356, %v1359
        %v1361 = vrot.slane %v1336, 4
        %v1362 = vsel %vm732, %v1361, %v1334
        %v1364 = vunpack.c.l.s4 1983009808
        %v1365 = vunpack.c.0.s8 %v1364
        %v1366 = vperm.slane %v1362, %v1365
        %v1367 = vrot.slane %v1366, 4
        %v1368 = vsel %vm732, %v1367, %v1360
        %v1370 = vunpack.c.l.s4 1934713408
        %v1371 = vunpack.c.0.s8 %v1370
        %v1372 = vperm.slane %v1368, %v1371
        %v1373 = vrot.slane %v1372, 4
        %v1374 = vsel %vm732, 0, %v1373
        %v1377 = vpack.i.b16 %v1372, %v1353
        %v1378 = vshrl.u32 %v1353, 16
        %v1379 = vshrl.u32 %v1372, 16
        %v1380 = vpack.i.b16 %v1379, %v1378
        %v1383 = vpack.i.b16 %v1374, %v1355
        %v1384 = vshrl.u32 %v1355, 16
        %v1385 = vshrl.u32 %v1374, 16
        %v1386 = vpack.i.b16 %v1385, %v1384
        %v1387 = vunpack.c.l.b16 %v1380
        %v1388 = vpack.c.b16 %v1387, %v1387
        %1389 = vrot.lane.b32.xlu0 %v1388, 8
        %v1390 = vpop.permute.xlu0 %1389
        %v1391 = vunpack.c.l.b16 %v1383
        %v1392 = vpack.c.b16 %v1391, %v1391
        %1393 = vrot.lane.b32.xlu0 %v1392, 16
        %v1394 = vpop.permute.xlu0 %1393
        %v1395 = vunpack.c.l.b16 %v1386
        %v1396 = vpack.c.b16 %v1395, %v1395
        %1397 = vrot.lane.b32.xlu0 %v1396, 24
        %v1398 = vpop.permute.xlu0 %1397
        %v1401 = vsel %vm1067, %v1377, %v1390
        %vm1402 = vcmask 130048
        %v1404 = vsel %vm1402, %v1401, %v1394
        %vm1405 = vcmask 195584
        %v1407 = vsel %vm1405, %v1404, %v1398
        %v1408 = vld [vmem:[#allocation5] sm:$0xf]
        %v1409 = vld [vmem:[#allocation5 + $0x4] sm:$0xf]
        %v1410 = vld [vmem:[#allocation5 + $0x8] sm:$0xf]
        %v1411 = vld [vmem:[#allocation5 + $0xc] sm:$0xf]
        %v1412 = vld [vmem:[%s7] sm:$0x1]
        %v1414 = vperm.slane %v1412, 0
        %v1420 = vunpack.c.l.b16 %v1408
        %v1421 = vunpack.c.l.b16 %v1409
        %v1422 = vunpack.c.l.b16 %v1410
        %v1423 = vunpack.c.l.b16 %v1411
        %v1424 = vpack.c.b16 %v1421, %v1420
        %v1425 = vpack.c.b16 %v1423, %v1422
        %v1428 = vsel %vm647, %v1407, 0
        %1430 = vmatpush.bf16.msra.mxu0 0
        %1431 = vmatpush.bf16.msra.mxu0 0
        %1432 = vmatpush.bf16.msra.mxu0 0
        %1433 = vmatpush.bf16.msra.mxu0 0
        %1434 = vmatpush.bf16.msra.mxu0 0
        %1435 = vmatpush.bf16.msra.mxu0 0
        %1436 = vmatpush.bf16.msra.mxu0 %v1425
        %1437 = vmatpush.bf16.msra.mxu0 %v1424
        %1438 = vmatmul.bf16.gmra.mxu0 %v1428
        %v1439 = vpop.f32.mrf.mxu0
        %v1440 = vadd.f32 %v1414, %v1439
        %v1441 = vpop.f32.mrf.mxu0
        %1442 = vdwg.mxu0
        %v1443 = vadd.f32 %v623, %v1440
        %v1444 = vld [vmem:[%s12] sm:$0x1]
        %v1445 = vld [vmem:[%s13] sm:$0x1]
        %v1446 = vsel %vm647, %v1443, 0.0
        %1447 = vadd.xlane.f32.xlu0 %v1446
        %v1448 = vpop.xlane.xlu0 %1447
        %v1449 = vrcp.pop 32.0
        %v1450 = vmul.f32 32.0, %v1449
        %v1451 = vsub.f32 1.0, %v1450
        %v1452 = vmul.f32 %v1449, %v1451
        %v1453 = vadd.f32 %v1449, %v1452
        %vm1454 = vweird.f32 %v1449
        %v1455 = vsel %vm1454, %v1449, %v1453
        %v1456 = vmul.f32 %v1448, %v1455
        %v1457 = vsub.f32 %v1443, %v1456
        %v1458 = vmul.f32 %v1457, %v1457
        %v1459 = vsel %vm647, %v1458, 0.0
        %1460 = vadd.xlane.f32.xlu0 %v1459
        %v1461 = vpop.xlane.xlu0 %1460
        %v1462 = vmul.f32 %v1461, %v1455
        %v1463 = vadd.f32 %v1462, 1e-05
        %v1464 = vrsqrt.pop %v1463
        %v1465 = vmul.f32 %v1464, %v1463
        %v1466 = vmul.f32 %v1465, %v1464
        %v1467 = vmul.f32 0.5, %v1466
        %v1468 = vsub.f32 1.5, %v1467
        %v1469 = vmul.f32 %v1464, %v1468
        %vm1470 = vweird.f32 %v1463
        %vm1471 = vweird.f32 %v1464
        %vm1472 = vmor %vm1470, %vm1471
        %v1473 = vsel %vm1472, %v1464, %v1469
        %v1474 = vmul.f32 %v1457, %v1473
        %v1476 = vperm.slane %v1444, 0
        %v1478 = vmul.f32 %v1474, %v1476
        %v1480 = vperm.slane %v1445, 0
        %v1482 = vadd.f32 %v1478, %v1480
        %v1483 = vpack.c.bf16 %v1482, %v1482
        %v1484 = vld [vmem:[#allocation7] sm:$0xf]
        %v1485 = vld [vmem:[#allocation7 + $0x4] sm:$0xf]
        %v1486 = vld [vmem:[#allocation7 + $0x8] sm:$0xf]
        %v1487 = vld [vmem:[#allocation7 + $0xc] sm:$0xf]
        %v1488 = vld [vmem:[%s9] sm:$0x1]
        %v1490 = vperm.slane %v1488, 0
        %v1496 = vunpack.c.l.b16 %v1484
        %v1497 = vunpack.c.l.b16 %v1485
        %v1498 = vunpack.c.l.b16 %v1486
        %v1499 = vunpack.c.l.b16 %v1487
        %v1500 = vpack.c.b16 %v1497, %v1496
        %v1501 = vpack.c.b16 %v1499, %v1498
        %v1505 = vsel %vm647, %v1483, 0
        %1507 = vmatpush.bf16.msra.mxu0 0
        %1508 = vmatpush.bf16.msra.mxu0 0
        %1509 = vmatpush.bf16.msra.mxu0 0
        %1510 = vmatpush.bf16.msra.mxu0 0
        %1511 = vmatpush.bf16.msra.mxu0 0
        %1512 = vmatpush.bf16.msra.mxu0 0
        %1513 = vmatpush.bf16.msra.mxu0 %v1501
        %1514 = vmatpush.bf16.msra.mxu0 %v1500
        %1515 = vmatmul.bf16.gmra.mxu0 %v1505
        %v1516 = vpop.f32.mrf.mxu0
        %v1517 = vadd.f32 %v1490, %v1516
        %v1518 = vpop.f32.mrf.mxu0
        %1519 = vdwg.mxu0
        %v1520 = vmax.f32 %v1517, 0.0
        %v1521 = vpack.c.bf16 %v1520, %v1520
        %v1522 = vld [vmem:[%s10] sm:$0xf]
        %v1523 = vld [vmem:[%s10 + $0x4] sm:$0xf]
        %v1524 = vld [vmem:[%s10 + $0x8] sm:$0xf]
        %v1525 = vld [vmem:[%s10 + $0xc] sm:$0xf]
        %v1526 = vld [vmem:[%s10 + $0x10] sm:$0xf]
        %v1527 = vld [vmem:[%s10 + $0x14] sm:$0xf]
        %v1528 = vld [vmem:[%s10 + $0x18] sm:$0xf]
        %v1529 = vld [vmem:[%s10 + $0x1c] sm:$0xf]
        %v1530 = vld [vmem:[%s11] sm:$0x1]
        %v1532 = vperm.slane %v1530, 0
        %v1542 = vunpack.c.l.b16 %v1522
        %v1543 = vunpack.c.l.b16 %v1523
        %v1544 = vunpack.c.l.b16 %v1524
        %v1545 = vunpack.c.l.b16 %v1525
        %v1546 = vunpack.c.l.b16 %v1526
        %v1547 = vunpack.c.l.b16 %v1527
        %v1548 = vunpack.c.l.b16 %v1528
        %v1549 = vunpack.c.l.b16 %v1529
        %v1550 = vpack.c.b16 %v1543, %v1542
        %v1551 = vpack.c.b16 %v1545, %v1544
        %v1552 = vpack.c.b16 %v1547, %v1546
        %v1553 = vpack.c.b16 %v1549, %v1548
        %vm1558 = vcmask 523264
        %v1560 = vsel %vm1558, %v1521, 0
        %1562 = vmatpush.bf16.msra.mxu0 0
        %1563 = vmatpush.bf16.msra.mxu0 0
        %1564 = vmatpush.bf16.msra.mxu0 0
        %1565 = vmatpush.bf16.msra.mxu0 0
        %1566 = vmatpush.bf16.msra.mxu0 %v1553
        %1567 = vmatpush.bf16.msra.mxu0 %v1552
        %1568 = vmatpush.bf16.msra.mxu0 %v1551
        %1569 = vmatpush.bf16.msra.mxu0 %v1550
        %1570 = vmatmul.bf16.gmra.mxu0 %v1560
        %v1571 = vpop.f32.mrf.mxu0
        %v1572 = vadd.f32 %v1532, %v1571
        %v1573 = vpop.f32.mrf.mxu0
        %1574 = vdwg.mxu0
        %v1575 = vadd.f32 %v1482, %v1572
        %v1576 = vld [vmem:[%s14] sm:$0x1]
        %v1577 = vld [vmem:[%s15] sm:$0x1]
        %v1578 = vsel %vm647, %v1575, 0.0
        %1579 = vadd.xlane.f32.xlu0 %v1578
        %v1580 = vpop.xlane.xlu0 %1579
        %v1581 = vmul.f32 %v1580, %v1455
        %v1582 = vsub.f32 %v1575, %v1581
        %v1583 = vmul.f32 %v1582, %v1582
        %v1584 = vsel %vm647, %v1583, 0.0
        %1585 = vadd.xlane.f32.xlu0 %v1584
        %v1586 = vpop.xlane.xlu0 %1585
        %v1587 = vmul.f32 %v1586, %v1455
        %v1588 = vadd.f32 %v1587, 1e-05
        %v1589 = vrsqrt.pop %v1588
        %v1590 = vmul.f32 %v1589, %v1588
        %v1591 = vmul.f32 %v1590, %v1589
        %v1592 = vmul.f32 0.5, %v1591
        %v1593 = vsub.f32 1.5, %v1592
        %v1594 = vmul.f32 %v1589, %v1593
        %vm1595 = vweird.f32 %v1588
        %vm1596 = vweird.f32 %v1589
        %vm1597 = vmor %vm1595, %vm1596
        %v1598 = vsel %vm1597, %v1589, %v1594
        %v1599 = vmul.f32 %v1582, %v1598
        %v1601 = vperm.slane %v1576, 0
        %v1603 = vmul.f32 %v1599, %v1601
        %v1605 = vperm.slane %v1577, 0
        %v1607 = vadd.f32 %v1603, %v1605
        %1608 = vst.msk [vmem:[%s606] sm:$0xff] %vm647, %v1607
        %v1609 = vsel %vm1067, %v1184, 0.0
        %v1610 = vsel %vm1067, %v1185, 0.0
        %v1611 = vadd.f32 %v1609, %v1610
        %v1612 = vsel %vm1067, %v1186, 0.0
        %v1613 = vadd.f32 %v1611, %v1612
        %v1614 = vsel %vm1067, %v1187, 0.0
        %v1615 = vadd.f32 %v1613, %v1614
        %v1616 = vrcp.pop 4.0
        %v1617 = vmul.f32 4.0, %v1616
        %v1618 = vsub.f32 1.0, %v1617
        %v1619 = vmul.f32 %v1616, %v1618
        %v1620 = vadd.f32 %v1616, %v1619
        %vm1621 = vweird.f32 %v1616
        %v1622 = vsel %vm1621, %v1616, %v1620
        %v1623 = vmul.f32 %v1615, %v1622
        %1624 = vst.msk [vmem:[%s613] sm:$0xff] %vm1067, %v1623
        %s1625 = sand.u32 %s391, 1
        %s1626 = scalar_lea.sflag [#allocation4], %s1625
        %s1627 = sand.u32 %s391, 1
        %s1628 = smul.addr %s1627, 8
        %s1629 = scalar_lea.vmem [#allocation8], %s1628
        %s1630 = sand.u32 %s417, 1
        %s1631 = scalar_lea.sflag [#allocation10], %s1630
        %s1632 = sand.u32 %s417, 1
        %s1633 = smul.addr %s1632, 8
        %s1634 = scalar_lea.vmem [#allocation9], %s1633
        // Predicated region
        $region97: #{tpu_custom_call.1} parent=83 // pred_check
          %p1635 = pneg %p401
        $region98: #{tpu_custom_call.1} parent=83 // pred_check_branch
          %1637 = sbr.rel (%p1635) target = $region100
        $region99: #{tpu_custom_call.1} parent=83 // pred_region
          %1639 = vsyncadd %s1626, 0
          %s1640 = smul.addr %s37, 8
          %s1641 = scalar_lea.hbm %s16, %s1640
          %s1643 = sshll.u32 %s1629, 4
          %s1644 = int_to_ptr.vmem [resolvable:$true] %s1643
          %s1645 = sshll.u32 %s1641, 4
          %s1646 = int_to_ptr.hbm [resolvable:$true] %s1645
          %1648 = dma.vmem_to_hbm [thread:$0]  %s1644, 128, %s1646, %s1626
        $region100: #{tpu_custom_call.1} parent=83 // pred_fallthru
          _
        // Predicated region
        $region101: #{tpu_custom_call.1} parent=83 // pred_check
          %p1649 = pneg %p427
        $region102: #{tpu_custom_call.1} parent=83 // pred_check_branch
          %1651 = sbr.rel (%p1649) target = $region104
        $region103: #{tpu_custom_call.1} parent=83 // pred_region
          %1653 = vsyncadd %s1631, 0
          %s1654 = smul.addr %s37, 8
          %s1655 = scalar_lea.hbm %s17, %s1654
          %s1657 = sshll.u32 %s1634, 4
          %s1658 = int_to_ptr.vmem [resolvable:$true] %s1657
          %s1659 = sshll.u32 %s1655, 4
          %s1660 = int_to_ptr.hbm [resolvable:$true] %s1659
          %1662 = dma.vmem_to_hbm [thread:$0]  %s1658, 128, %s1660, %s1631
        $region104: #{tpu_custom_call.1} parent=83 // pred_fallthru
          _
      $region84: #{tpu_custom_call.1} parent=5 // pred_fallthru
        _
      %p1663 = scmp.le.s32.totalorder 2, %s32
      // Predicated region
      $region105: #{tpu_custom_call.1} parent=5 // pred_check
        %p1664 = pneg %p1663
      $region106: #{tpu_custom_call.1} parent=5 // pred_check_branch
        %1666 = sbr.rel (%p1664) target = $region108
      $region107: #{tpu_custom_call.1} parent=5 // pred_region
        %s1667 = ssub.s32 %s32, 2
        // Predicated region
        $region109: #{tpu_custom_call.1} parent=107 // pred_check
          %p1668 = pneg %p407
        $region110: #{tpu_custom_call.1} parent=107 // pred_check_branch
          %1670 = sbr.rel (%p1668) target = $region112
        $region111: #{tpu_custom_call.1} parent=107 // pred_region
          %s1671 = sand.u32 %s392, 1
          %s1672 = scalar_lea.sflag [#allocation4], %s1671
          %s1673 = sand.u32 %s392, 1
          %s1674 = smul.addr %s1673, 8
          %s1675 = scalar_lea.vmem [#allocation8], %s1674
          %1677 = dma.done %s1672, 128
        $region112: #{tpu_custom_call.1} parent=107 // pred_fallthru
          _
        // Predicated region
        $region113: #{tpu_custom_call.1} parent=107 // pred_check
          %p1678 = pneg %p433
        $region114: #{tpu_custom_call.1} parent=107 // pred_check_branch
          %1680 = sbr.rel (%p1678) target = $region116
        $region115: #{tpu_custom_call.1} parent=107 // pred_region
          %s1681 = sand.u32 %s418, 1
          %s1682 = scalar_lea.sflag [#allocation10], %s1681
          %s1683 = sand.u32 %s418, 1
          %s1684 = smul.addr %s1683, 8
          %s1685 = scalar_lea.vmem [#allocation9], %s1684
          %1687 = dma.done %s1682, 128
        $region116: #{tpu_custom_call.1} parent=107 // pred_fallthru
          _
      $region108: #{tpu_custom_call.1} parent=5 // pred_fallthru
        _
    $region6: #{tpu_custom_call.1} parent=1 // loop_footer
      %s36 = sadd.s32 1, %s32
    $region7: #{tpu_custom_call.1} parent=1 // loop_footer_branch
      %31 = sbr.rel target = $region3
    $region8: #{tpu_custom_call.1} parent=1 // loop_exit
      _
    %1688 = vsyncpa [#allocation3], 1
    %s1689 = scalar_lea.sflag [#allocation3], 1
    %1690 = vsyncpa %s1689, 1
    %1691 = vsyncpa [#allocation6], 1
    %1692 = vsyncpa [#allocation4], 1
    %s1693 = scalar_lea.sflag [#allocation4], 1
    %1694 = vsyncpa %s1693, 1
    %1695 = vsyncpa [#allocation10], 1
    %s1696 = scalar_lea.sflag [#allocation10], 1
    %1697 = vsyncpa %s1696, 1

</llo_original>
